<compile_context>
chip_gen: v6e
topology: v6e:2x2x1
jax: 0.10.0
libtpu: 0.0.40
codegen_flags: <defaults>
</compile_context>

<pallas_src>
import functools

import jax
import jax.numpy as jnp
from jax.experimental import pallas as pl
from jax.experimental.pallas import tpu as pltpu


PARAM_ORDER = ("ln1_w", "ln1_b", "wqkv_t", "bqkv", "wo_t", "bo",
               "ln2_w", "ln2_b", "wfc_t", "bfc", "wproj_t", "bproj")


def _layernorm_f32(v, w, b, eps=1e-5):
    # fp32 LayerNorm (matches the fp16-safe LayerNorm subclass).
    mu = jnp.mean(v, axis=-1, keepdims=True)
    var = jnp.mean(jnp.square(v - mu), axis=-1, keepdims=True)
    return (v - mu) * jax.lax.rsqrt(var + eps) * w + b


def fused_transformer_kernel(
    x_ref,
    ln1_w_ref, ln1_b_ref,
    wqkv_ref, bqkv_ref,        # (D, 3D) bf16 (scale folded into Q), (1, 3D) f32
    wo_ref, bo_ref,            # (D, D)  bf16 pre-transposed,        (1, D)  f32
    ln2_w_ref, ln2_b_ref,
    wfc_ref, bfc_ref,          # (D, 4D) bf16 pre-transposed,        (1, 4D) f32
    wproj_ref, bproj_ref,      # (4D, D) bf16 pre-transposed,        (1, D)  f32
    o_ref,                     # (Rb, D) — resident residual accumulator
    *, n_head: int, seq_len: int, batch_tile: int, mlp_row_tile: int,
):
    layer = pl.program_id(1)
    R, D = o_ref.shape
    L, N, H = seq_len, batch_tile, n_head
    hd = D // H
    assert R == N * L

    # Seed the resident output block with the kernel input at layer 0; from
    # then on o_ref itself carries the residual stream across the layer axis.
    @pl.when(layer == 0)
    def _():
        o_ref[...] = x_ref[...]

    x = o_ref[...].astype(jnp.float32)                           # (R, D) f32

    # ------------- attention branch: x + out_proj(attn(ln_1(x))) ----------
    y = _layernorm_f32(x, ln1_w_ref[...], ln1_b_ref[...])

    # fused QKV projection (1/sqrt(hd) already folded into the Q columns);
    # stored intermediate kept in bf16 to halve VMEM / vld traffic.
    qkv = (jnp.dot(y.astype(jnp.bfloat16), wqkv_ref[...],
                   preferred_element_type=jnp.float32)
           + bqkv_ref[...])                                      # (R, 3D) f32
    qkv = qkv.astype(jnp.bfloat16).reshape(N, L, 3 * D)

    # Per-head loop (H small, static): static lane slices + leading-batch
    # einsums — no per-(batch,head) unrolled slice/stack shuffle.
    ctx_heads = []
    for h in range(H):
        q = qkv[:, :, h * hd:(h + 1) * hd]                       # (N, L, hd)
        k = qkv[:, :, D + h * hd:D + (h + 1) * hd]
        v = qkv[:, :, 2 * D + h * hd:2 * D + (h + 1) * hd]
        s = jnp.einsum('nld,nmd->nlm', q, k,
                       preferred_element_type=jnp.float32)       # (N, L, L)
        s = s - jnp.max(s, axis=-1, keepdims=True)
        p = jnp.exp(s)
        p = p * pl.reciprocal(jnp.sum(p, axis=-1, keepdims=True), approx=True)
        ctx_heads.append(
            jnp.einsum('nlm,nmd->nld', p.astype(jnp.bfloat16), v,
                       preferred_element_type=jnp.float32))      # (N, L, hd)
    ctx = jnp.concatenate(ctx_heads, axis=-1).reshape(R, D)      # (R, D) f32

    attn_out = (jnp.dot(ctx.astype(jnp.bfloat16), wo_ref[...],
                        preferred_element_type=jnp.float32)
                + bo_ref[...])
    x = x + attn_out

    # ------------- MLP branch: x + c_proj(QuickGELU(c_fc(ln_2(x)))) -------
    # Row-chunked so the (rows, 4D) hidden never exceeds mlp_row_tile rows.
    ln2_w = ln2_w_ref[...]
    ln2_b = ln2_b_ref[...]
    wfc = wfc_ref[...]
    bfc = bfc_ref[...]
    wproj = wproj_ref[...]
    bproj = bproj_ref[...]
    for start in range(0, R, mlp_row_tile):
        rows = min(mlp_row_tile, R - start)
        xc = x[start:start + rows, :]
        z = _layernorm_f32(xc, ln2_w, ln2_b)
        h1 = (jnp.dot(z.astype(jnp.bfloat16), wfc,
                      preferred_element_type=jnp.float32) + bfc)   # (rows, 4D)
        h1 = (h1 * jax.nn.sigmoid(1.702 * h1)).astype(jnp.bfloat16)  # QuickGELU
        m = (jnp.dot(h1, wproj, preferred_element_type=jnp.float32)
             + bproj)                                              # (rows, D)
        o_ref[pl.ds(start, rows), :] = (xc + m).astype(o_ref.dtype)


def _vmem_limit_bytes(stacked_args, num_layers, rows_block, d_model,
                      batch_tile, seq_len, mlp_row_tile):
    """Budget = double-buffered per-layer weight stream + activation blocks +
    largest in-flight intermediates, clipped to physical VMEM."""
    per_layer_params = sum(int(a.size) * a.dtype.itemsize
                           for a in stacked_args) // max(num_layers, 1)
    weight_stream = 2 * per_layer_params                       # double-buffered
    act = 4 * rows_block * d_model * 4                         # x + o blocks
    inter = (rows_block * 3 * d_model * 6                      # qkv f32 + bf16
             + batch_tile * seq_len * seq_len * 8              # scores + probs (1 head)
             + rows_block * d_model * 12                       # ctx / attn_out / LN temps
             + mlp_row_tile * 4 * d_model * 8)                 # MLP hidden f32 + bf16
    need = weight_stream + act + inter + (8 << 20)             # compiler slack
    try:
        cap = int(pltpu.get_tpu_info().vmem_capacity_bytes)
    except Exception:
        cap = 64 << 20                                         # conservative (v7x)
    return int(min(max(need, 32 << 20), int(cap * 0.9)))


def transformer(x, stacked_params, n_head, *, batch_tile=None, mlp_row_tile=None):
    """x: (L, N, D) — PyTorch seq-first layout. Returns (L, N, D)."""
    L, N, D = x.shape
    assert D % n_head == 0, "d_model must be divisible by n_head"
    num_layers = stacked_params["wqkv_t"].shape[0]

    # Batch tile: largest divisor of N whose row block (batch_tile*L) is a
    # multiple of 8 and <= ~1024 rows; the batch-tile grid axis is "parallel"
    # (megacore sharding on v7x) and caps per-step activation VMEM.
    if batch_tile is None:
        batch_tile = N
        limit = min(N, max(1, 1024 // max(L, 1)))
        for nb in range(limit, 0, -1):
            if N % nb == 0 and (nb * L) % 8 == 0:
                batch_tile = nb
                break
    assert N % batch_tile == 0
    Rb = batch_tile * L
    assert batch_tile == N or Rb % 8 == 0, \
        "batch-tiled row block must be a multiple of 8 (pad L host-side)"
    if mlp_row_tile is None:
        mlp_row_tile = Rb if Rb <= 512 else 512

    # Work in (N, L, D) so attention batch is the leading dim; rows = (n, l).
    x_nl = jnp.transpose(x, (1, 0, 2)).reshape(N * L, D)
    args = [stacked_params[k] for k in PARAM_ORDER]

    # Stacked params are (layers, a, b): select layer l, squeeze leading dim.
    param_specs = [
        pl.BlockSpec((None,) + a.shape[1:], lambda bt, l: (l, 0, 0))
        for a in args
    ]
    in_act_spec = pl.BlockSpec((Rb, D), lambda bt, l: (bt, 0))
    out_act_spec = pl.BlockSpec((Rb, D), lambda bt, l: (bt, 0))

    vmem_limit = _vmem_limit_bytes(args, num_layers, Rb, D,
                                   batch_tile, L, mlp_row_tile)

    out = pl.pallas_call(
        functools.partial(fused_transformer_kernel, n_head=n_head, seq_len=L,
                          batch_tile=batch_tile, mlp_row_tile=mlp_row_tile),
        out_shape=jax.ShapeDtypeStruct((N * L, D), x.dtype),
        grid_spec=pltpu.PrefetchScalarGridSpec(
            num_scalar_prefetch=0,
            grid=(N // batch_tile, num_layers),
            in_specs=[in_act_spec] + param_specs,
            out_specs=out_act_spec,
        ),
        input_output_aliases={0: 0},
        compiler_params=pltpu.CompilerParams(
            dimension_semantics=("parallel", "arbitrary"),
            vmem_limit_bytes=vmem_limit,
        ),
    )(x_nl, *args)
    return jnp.transpose(out.reshape(N, L, D), (1, 0, 2))


def init_layer_params(key, d_model):
    """PyTorch-layout parameters for one ResidualAttentionBlock."""
    D = d_model
    ks = jax.random.split(key, 4)
    s = 0.02
    return dict(
        ln1_w=jnp.ones((D,), jnp.float32),
        ln1_b=jnp.zeros((D,), jnp.float32),
        wqkv=jax.random.normal(ks[0], (3 * D, D), jnp.float32) * s,  # in_proj
        bqkv=jnp.zeros((3 * D,), jnp.float32),
        wo=jax.random.normal(ks[1], (D, D), jnp.float32) * s,        # out_proj
        bo=jnp.zeros((D,), jnp.float32),
        ln2_w=jnp.ones((D,), jnp.float32),
        ln2_b=jnp.zeros((D,), jnp.float32),
        wfc=jax.random.normal(ks[2], (4 * D, D), jnp.float32) * s,   # c_fc
        bfc=jnp.zeros((4 * D,), jnp.float32),
        wproj=jax.random.normal(ks[3], (D, 4 * D), jnp.float32) * s, # c_proj
        bproj=jnp.zeros((D,), jnp.float32),
    )


def pack_params(layer_params, n_head):
    """Host-side one-time prep: transpose weights to (in, out), fold the
    1/sqrt(head_dim) scale into the Q projection, cast MXU operands to bf16,
    and stack all layers so one pallas_call grid can stream them."""
    D = layer_params[0]["ln1_w"].shape[0]
    hd = D // n_head
    q_scale = jnp.concatenate(
        [jnp.full((D,), float(hd) ** -0.5, jnp.float32),
         jnp.ones((2 * D,), jnp.float32)])

    def one(p):
        wqkv_t = p["wqkv"].T * q_scale[None, :]            # (D, 3D)
        bqkv = p["bqkv"] * q_scale
        return dict(
            ln1_w=p["ln1_w"].reshape(1, D),
            ln1_b=p["ln1_b"].reshape(1, D),
            wqkv_t=wqkv_t.astype(jnp.bfloat16),
            bqkv=bqkv.reshape(1, 3 * D),
            wo_t=p["wo"].T.astype(jnp.bfloat16),           # (D, D)
            bo=p["bo"].reshape(1, D),
            ln2_w=p["ln2_w"].reshape(1, D),
            ln2_b=p["ln2_b"].reshape(1, D),
            wfc_t=p["wfc"].T.astype(jnp.bfloat16),         # (D, 4D)
            bfc=p["bfc"].reshape(1, 4 * D),
            wproj_t=p["wproj"].T.astype(jnp.bfloat16),     # (4D, D)
            bproj=p["bproj"].reshape(1, D),
        )

    per_layer = [one(p) for p in layer_params]
    return {k: jnp.stack([lp[k] for lp in per_layer], axis=0)
            for k in per_layer[0]}


def reference_forward(x, layer_params, n_head):
    """Pure-JAX fp32 reference matching the PyTorch module (attn_mask=None)."""
    L, N, D = x.shape
    H = n_head
    hd = D // H
    xb = jnp.transpose(x, (1, 0, 2)).astype(jnp.float32)   # (N, L, D)

    def ln(v, w, b, eps=1e-5):
        mu = v.mean(-1, keepdims=True)
        var = ((v - mu) ** 2).mean(-1, keepdims=True)
        return (v - mu) * jax.lax.rsqrt(var + eps) * w + b

    for p in layer_params:
        y = ln(xb, p["ln1_w"], p["ln1_b"])
        qkv = y @ p["wqkv"].T + p["bqkv"]                   # (N, L, 3D)
        q, k, v = jnp.split(qkv, 3, axis=-1)
        q = q * (float(hd) ** -0.5)
        qh = q.reshape(N, L, H, hd).transpose(0, 2, 1, 3)
        kh = k.reshape(N, L, H, hd).transpose(0, 2, 1, 3)
        vh = v.reshape(N, L, H, hd).transpose(0, 2, 1, 3)
        s = jnp.einsum('nhld,nhmd->nhlm', qh, kh)
        pr = jax.nn.softmax(s, axis=-1)
        ctx = jnp.einsum('nhlm,nhmd->nhld', pr, vh)
        ctx = ctx.transpose(0, 2, 1, 3).reshape(N, L, D)
        xb = xb + (ctx @ p["wo"].T + p["bo"])
        z = ln(xb, p["ln2_w"], p["ln2_b"])
        h1 = z @ p["wfc"].T + p["bfc"]
        h1 = h1 * jax.nn.sigmoid(1.702 * h1)
        xb = xb + (h1 @ p["wproj"].T + p["bproj"])
    return jnp.transpose(xb, (1, 0, 2))


if __name__ == "__main__":
    # Transformer(width=32, layers=2, heads=4, attn_mask=None)
    width, layers, heads = 32, 2, 4
    seq_len, batch = 8, 2

    key = jax.random.PRNGKey(0)
    key, xk = jax.random.split(key)
    x = jax.random.normal(xk, (seq_len, batch, width), jnp.float32)

    layer_keys = jax.random.split(key, layers)
    layer_params = [init_layer_params(k, width) for k in layer_keys]
    stacked = pack_params(layer_params, heads)

    # Exercise the batch-tiled ("parallel") grid path and the auto path.
    out_tiled = jax.block_until_ready(
        transformer(x, stacked, heads, batch_tile=1))   # grid = (2, layers)
    out_auto = jax.block_until_ready(
        transformer(x, stacked, heads))                 # grid = (1, layers)

    ref = reference_forward(x, layer_params, heads)

    assert out_tiled.shape == (seq_len, batch, width)
    assert bool(jnp.all(jnp.isfinite(out_tiled)))
    err1 = float(jnp.max(jnp.abs(out_tiled - ref)))
    err2 = float(jnp.max(jnp.abs(out_auto - ref)))
    # bf16 weights/activations on the MXU path + approx softmax reciprocal.
    assert err1 < 5e-2 and err2 < 5e-2, (err1, err2)
    print("KERNEL_OK")
</pallas_src>

<mosaic_0001>
module attributes {stable_mosaic.version = 11 : i64} {
  func.func @fused_transformer_kernel(%arg0: i32, %arg1: i32, %arg2: memref<8x32xf32, #tpu.memory_space<vmem>>, %arg3: memref<1x1x32xf32, #tpu.memory_space<vmem>>, %arg4: memref<1x1x32xf32, #tpu.memory_space<vmem>>, %arg5: memref<1x32x96xbf16, #tpu.memory_space<vmem>>, %arg6: memref<1x1x96xf32, #tpu.memory_space<vmem>>, %arg7: memref<1x32x32xbf16, #tpu.memory_space<vmem>>, %arg8: memref<1x1x32xf32, #tpu.memory_space<vmem>>, %arg9: memref<1x1x32xf32, #tpu.memory_space<vmem>>, %arg10: memref<1x1x32xf32, #tpu.memory_space<vmem>>, %arg11: memref<1x32x128xbf16, #tpu.memory_space<vmem>>, %arg12: memref<1x1x128xf32, #tpu.memory_space<vmem>>, %arg13: memref<1x128x32xbf16, #tpu.memory_space<vmem>>, %arg14: memref<1x1x32xf32, #tpu.memory_space<vmem>>, %arg15: memref<8x32xf32, #tpu.memory_space<vmem>>) attributes {dimension_semantics = [#tpu.dimension_semantics<parallel>, #tpu.dimension_semantics<arbitrary>], iteration_bounds = array<i64: 2, 2>, scalar_prefetch = 0 : i64, scratch_operands = 0 : i64, tpu.core_type = #tpu.core_type<tc>, window_params = [{transform_indices = @transform_0, window_bounds = array<i64: 8, 32>}, {transform_indices = @transform_1, window_bounds = array<i64: 1, 1, 32>}, {transform_indices = @transform_2, window_bounds = array<i64: 1, 1, 32>}, {transform_indices = @transform_3, window_bounds = array<i64: 1, 32, 96>}, {transform_indices = @transform_4, window_bounds = array<i64: 1, 1, 96>}, {transform_indices = @transform_5, window_bounds = array<i64: 1, 32, 32>}, {transform_indices = @transform_6, window_bounds = array<i64: 1, 1, 32>}, {transform_indices = @transform_7, window_bounds = array<i64: 1, 1, 32>}, {transform_indices = @transform_8, window_bounds = array<i64: 1, 1, 32>}, {transform_indices = @transform_9, window_bounds = array<i64: 1, 32, 128>}, {transform_indices = @transform_10, window_bounds = array<i64: 1, 1, 128>}, {transform_indices = @transform_11, window_bounds = array<i64: 1, 128, 32>}, {transform_indices = @transform_12, window_bounds = array<i64: 1, 1, 32>}, {transform_indices = @transform_13, window_bounds = array<i64: 8, 32>}]} {
    %c0_i32 = arith.constant 0 : i32
    %0 = arith.cmpi eq, %arg1, %c0_i32 : i32
    %1 = arith.extui %0 : i1 to i32
    %c0_i32_0 = arith.constant 0 : i32
    %2 = arith.cmpi ne, %1, %c0_i32_0 : i32
    scf.if %2 {
      %c0_71 = arith.constant 0 : index
      %c0_72 = arith.constant 0 : index
      %167 = vector.load %arg2[%c0_71, %c0_72] : memref<8x32xf32, #tpu.memory_space<vmem>>, vector<8x32xf32>
      %c0_73 = arith.constant 0 : index
      %c0_74 = arith.constant 0 : index
      %168 = vector.load %arg15[%c0_73, %c0_74] : memref<8x32xf32, #tpu.memory_space<vmem>>, vector<8x32xf32>
      tpu.vector_store %arg15[%c0_73, %c0_74], %167 {strides = array<i32>} : memref<8x32xf32, #tpu.memory_space<vmem>>, vector<8x32xf32>,
    } else {
    }
    %c0 = arith.constant 0 : index
    %c0_1 = arith.constant 0 : index
    %3 = vector.load %arg15[%c0, %c0_1] : memref<8x32xf32, #tpu.memory_space<vmem>>, vector<8x32xf32>
    %c0_2 = arith.constant 0 : index
    %c0_3 = arith.constant 0 : index
    %c0_4 = arith.constant 0 : index
    %4 = vector.load %arg3[%c0_2, %c0_3, %c0_4] : memref<1x1x32xf32, #tpu.memory_space<vmem>>, vector<1x1x32xf32>
    %5 = vector.shape_cast %4 : vector<1x1x32xf32> to vector<1x32xf32>
    %c0_5 = arith.constant 0 : index
    %c0_6 = arith.constant 0 : index
    %c0_7 = arith.constant 0 : index
    %6 = vector.load %arg4[%c0_5, %c0_6, %c0_7] : memref<1x1x32xf32, #tpu.memory_space<vmem>>, vector<1x1x32xf32>
    %7 = vector.shape_cast %6 : vector<1x1x32xf32> to vector<1x32xf32>
    %cst = arith.constant dense<0.000000e+00> : vector<8xf32>
    %8 = vector.multi_reduction <add>, %3, %cst [1] : vector<8x32xf32> to vector<8xf32>
    %9 = vector.shape_cast %8 : vector<8xf32> to vector<8x1xf32>
    %cst_8 = arith.constant 3.200000e+01 : f32
    %10 = vector.broadcast %cst_8 : f32 to vector<8x1xf32>
    %11 = arith.divf %9, %10 : vector<8x1xf32>
    %12 = vector.broadcast %11 : vector<8x1xf32> to vector<8x32xf32>
    %13 = arith.subf %3, %12 : vector<8x32xf32>
    %14 = arith.mulf %13, %13 : vector<8x32xf32>
    %cst_9 = arith.constant dense<0.000000e+00> : vector<8xf32>
    %15 = vector.multi_reduction <add>, %14, %cst_9 [1] : vector<8x32xf32> to vector<8xf32>
    %16 = vector.shape_cast %15 : vector<8xf32> to vector<8x1xf32>
    %cst_10 = arith.constant 3.200000e+01 : f32
    %17 = vector.broadcast %cst_10 : f32 to vector<8x1xf32>
    %18 = arith.divf %16, %17 : vector<8x1xf32>
    %19 = vector.broadcast %11 : vector<8x1xf32> to vector<8x32xf32>
    %20 = arith.subf %3, %19 : vector<8x32xf32>
    %cst_11 = arith.constant 9.99999974E-6 : f32
    %21 = vector.broadcast %cst_11 : f32 to vector<8x1xf32>
    %22 = arith.addf %18, %21 : vector<8x1xf32>
    %23 = math.rsqrt %22 : vector<8x1xf32>
    %24 = vector.broadcast %23 : vector<8x1xf32> to vector<8x32xf32>
    %25 = arith.mulf %20, %24 : vector<8x32xf32>
    %26 = vector.broadcast %5 : vector<1x32xf32> to vector<8x32xf32>
    %27 = arith.mulf %25, %26 : vector<8x32xf32>
    %28 = vector.broadcast %7 : vector<1x32xf32> to vector<8x32xf32>
    %29 = arith.addf %27, %28 : vector<8x32xf32>
    %30 = arith.truncf %29 : vector<8x32xf32> to vector<8x32xbf16>
    %c0_12 = arith.constant 0 : index
    %c0_13 = arith.constant 0 : index
    %c0_14 = arith.constant 0 : index
    %31 = vector.load %arg5[%c0_12, %c0_13, %c0_14] : memref<1x32x96xbf16, #tpu.memory_space<vmem>>, vector<1x32x96xbf16>
    %32 = vector.shape_cast %31 : vector<1x32x96xbf16> to vector<32x96xbf16>
    %cst_15 = arith.constant dense<0.000000e+00> : vector<8x96xf32>
    %33 = tpu.matmul %30, %32, %cst_15 {dimension_numbers = #tpu.dot_dimension_numbers<[1], [0], [0], [1], [0, 0, 1, 1], [], []>} : vector<8x32xbf16>, vector<32x96xbf16>, vector<8x96xf32> -> vector<8x96xf32>
    %c0_16 = arith.constant 0 : index
    %c0_17 = arith.constant 0 : index
    %c0_18 = arith.constant 0 : index
    %34 = vector.load %arg6[%c0_16, %c0_17, %c0_18] : memref<1x1x96xf32, #tpu.memory_space<vmem>>, vector<1x1x96xf32>
    %35 = vector.shape_cast %34 : vector<1x1x96xf32> to vector<1x96xf32>
    %36 = vector.broadcast %35 : vector<1x96xf32> to vector<8x96xf32>
    %37 = arith.addf %33, %36 : vector<8x96xf32>
    %38 = arith.truncf %37 : vector<8x96xf32> to vector<8x96xbf16>
    %39 = vector.shape_cast %38 : vector<8x96xbf16> to vector<1x8x96xbf16>
    %40 = vector.extract_strided_slice %39 {offsets = [0, 0, 0], sizes = [1, 8, 8], strides = [1, 1, 1]} : vector<1x8x96xbf16> to vector<1x8x8xbf16>
    %41 = vector.extract_strided_slice %39 {offsets = [0, 0, 32], sizes = [1, 8, 8], strides = [1, 1, 1]} : vector<1x8x96xbf16> to vector<1x8x8xbf16>
    %42 = vector.extract_strided_slice %39 {offsets = [0, 0, 64], sizes = [1, 8, 8], strides = [1, 1, 1]} : vector<1x8x96xbf16> to vector<1x8x8xbf16>
    "tpu.trace_start"() <{level = 10 : i32, message = "nld,nmd->nlm"}> : () -> ()
    %cst_19 = arith.constant dense<0.000000e+00> : vector<1x8x8xf32>
    %43 = tpu.matmul %40, %41, %cst_19 {dimension_numbers = #tpu.dot_dimension_numbers<[2], [2], [1], [1], [0, 0, 0, 1, 1, 1], [0], [0]>} : vector<1x8x8xbf16>, vector<1x8x8xbf16>, vector<1x8x8xf32> -> vector<1x8x8xf32>
    "tpu.trace_stop"() : () -> ()
    %cst_20 = arith.constant dense<0xFF800000> : vector<1x8xf32>
    %44 = vector.multi_reduction <maximumf>, %43, %cst_20 [2] : vector<1x8x8xf32> to vector<1x8xf32>
    %45 = vector.shape_cast %44 : vector<1x8xf32> to vector<1x8x1xf32>
    %46 = vector.broadcast %45 : vector<1x8x1xf32> to vector<1x8x8xf32>
    %47 = arith.subf %43, %46 : vector<1x8x8xf32>
    %48 = math.exp %47 : vector<1x8x8xf32>
    %cst_21 = arith.constant dense<0.000000e+00> : vector<1x8xf32>
    %49 = vector.multi_reduction <add>, %48, %cst_21 [2] : vector<1x8x8xf32> to vector<1x8xf32>
    %50 = vector.shape_cast %49 : vector<1x8xf32> to vector<1x8x1xf32>
    %51 = tpu.reciprocal %50 {approx = true} : vector<1x8x1xf32> -> vector<1x8x1xf32>
    %52 = vector.broadcast %51 : vector<1x8x1xf32> to vector<1x8x8xf32>
    %53 = arith.mulf %48, %52 : vector<1x8x8xf32>
    %54 = arith.truncf %53 : vector<1x8x8xf32> to vector<1x8x8xbf16>
    "tpu.trace_start"() <{level = 10 : i32, message = "nlm,nmd->nld"}> : () -> ()
    %cst_22 = arith.constant dense<0.000000e+00> : vector<1x8x8xf32>
    %55 = tpu.matmul %54, %42, %cst_22 {dimension_numbers = #tpu.dot_dimension_numbers<[2], [1], [1], [2], [0, 0, 0, 1, 1, 2], [0], [0]>} : vector<1x8x8xbf16>, vector<1x8x8xbf16>, vector<1x8x8xf32> -> vector<1x8x8xf32>
    "tpu.trace_stop"() : () -> ()
    %56 = vector.extract_strided_slice %39 {offsets = [0, 0, 8], sizes = [1, 8, 8], strides = [1, 1, 1]} : vector<1x8x96xbf16> to vector<1x8x8xbf16>
    %57 = vector.extract_strided_slice %39 {offsets = [0, 0, 40], sizes = [1, 8, 8], strides = [1, 1, 1]} : vector<1x8x96xbf16> to vector<1x8x8xbf16>
    %58 = vector.extract_strided_slice %39 {offsets = [0, 0, 72], sizes = [1, 8, 8], strides = [1, 1, 1]} : vector<1x8x96xbf16> to vector<1x8x8xbf16>
    "tpu.trace_start"() <{level = 10 : i32, message = "nld,nmd->nlm"}> : () -> ()
    %cst_23 = arith.constant dense<0.000000e+00> : vector<1x8x8xf32>
    %59 = tpu.matmul %56, %57, %cst_23 {dimension_numbers = #tpu.dot_dimension_numbers<[2], [2], [1], [1], [0, 0, 0, 1, 1, 1], [0], [0]>} : vector<1x8x8xbf16>, vector<1x8x8xbf16>, vector<1x8x8xf32> -> vector<1x8x8xf32>
    "tpu.trace_stop"() : () -> ()
    %cst_24 = arith.constant dense<0xFF800000> : vector<1x8xf32>
    %60 = vector.multi_reduction <maximumf>, %59, %cst_24 [2] : vector<1x8x8xf32> to vector<1x8xf32>
    %61 = vector.shape_cast %60 : vector<1x8xf32> to vector<1x8x1xf32>
    %62 = vector.broadcast %61 : vector<1x8x1xf32> to vector<1x8x8xf32>
    %63 = arith.subf %59, %62 : vector<1x8x8xf32>
    %64 = math.exp %63 : vector<1x8x8xf32>
    %cst_25 = arith.constant dense<0.000000e+00> : vector<1x8xf32>
    %65 = vector.multi_reduction <add>, %64, %cst_25 [2] : vector<1x8x8xf32> to vector<1x8xf32>
    %66 = vector.shape_cast %65 : vector<1x8xf32> to vector<1x8x1xf32>
    %67 = tpu.reciprocal %66 {approx = true} : vector<1x8x1xf32> -> vector<1x8x1xf32>
    %68 = vector.broadcast %67 : vector<1x8x1xf32> to vector<1x8x8xf32>
    %69 = arith.mulf %64, %68 : vector<1x8x8xf32>
    %70 = arith.truncf %69 : vector<1x8x8xf32> to vector<1x8x8xbf16>
    "tpu.trace_start"() <{level = 10 : i32, message = "nlm,nmd->nld"}> : () -> ()
    %cst_26 = arith.constant dense<0.000000e+00> : vector<1x8x8xf32>
    %71 = tpu.matmul %70, %58, %cst_26 {dimension_numbers = #tpu.dot_dimension_numbers<[2], [1], [1], [2], [0, 0, 0, 1, 1, 2], [0], [0]>} : vector<1x8x8xbf16>, vector<1x8x8xbf16>, vector<1x8x8xf32> -> vector<1x8x8xf32>
    "tpu.trace_stop"() : () -> ()
    %72 = vector.extract_strided_slice %39 {offsets = [0, 0, 16], sizes = [1, 8, 8], strides = [1, 1, 1]} : vector<1x8x96xbf16> to vector<1x8x8xbf16>
    %73 = vector.extract_strided_slice %39 {offsets = [0, 0, 48], sizes = [1, 8, 8], strides = [1, 1, 1]} : vector<1x8x96xbf16> to vector<1x8x8xbf16>
    %74 = vector.extract_strided_slice %39 {offsets = [0, 0, 80], sizes = [1, 8, 8], strides = [1, 1, 1]} : vector<1x8x96xbf16> to vector<1x8x8xbf16>
    "tpu.trace_start"() <{level = 10 : i32, message = "nld,nmd->nlm"}> : () -> ()
    %cst_27 = arith.constant dense<0.000000e+00> : vector<1x8x8xf32>
    %75 = tpu.matmul %72, %73, %cst_27 {dimension_numbers = #tpu.dot_dimension_numbers<[2], [2], [1], [1], [0, 0, 0, 1, 1, 1], [0], [0]>} : vector<1x8x8xbf16>, vector<1x8x8xbf16>, vector<1x8x8xf32> -> vector<1x8x8xf32>
    "tpu.trace_stop"() : () -> ()
    %cst_28 = arith.constant dense<0xFF800000> : vector<1x8xf32>
    %76 = vector.multi_reduction <maximumf>, %75, %cst_28 [2] : vector<1x8x8xf32> to vector<1x8xf32>
    %77 = vector.shape_cast %76 : vector<1x8xf32> to vector<1x8x1xf32>
    %78 = vector.broadcast %77 : vector<1x8x1xf32> to vector<1x8x8xf32>
    %79 = arith.subf %75, %78 : vector<1x8x8xf32>
    %80 = math.exp %79 : vector<1x8x8xf32>
    %cst_29 = arith.constant dense<0.000000e+00> : vector<1x8xf32>
    %81 = vector.multi_reduction <add>, %80, %cst_29 [2] : vector<1x8x8xf32> to vector<1x8xf32>
    %82 = vector.shape_cast %81 : vector<1x8xf32> to vector<1x8x1xf32>
    %83 = tpu.reciprocal %82 {approx = true} : vector<1x8x1xf32> -> vector<1x8x1xf32>
    %84 = vector.broadcast %83 : vector<1x8x1xf32> to vector<1x8x8xf32>
    %85 = arith.mulf %80, %84 : vector<1x8x8xf32>
    %86 = arith.truncf %85 : vector<1x8x8xf32> to vector<1x8x8xbf16>
    "tpu.trace_start"() <{level = 10 : i32, message = "nlm,nmd->nld"}> : () -> ()
    %cst_30 = arith.constant dense<0.000000e+00> : vector<1x8x8xf32>
    %87 = tpu.matmul %86, %74, %cst_30 {dimension_numbers = #tpu.dot_dimension_numbers<[2], [1], [1], [2], [0, 0, 0, 1, 1, 2], [0], [0]>} : vector<1x8x8xbf16>, vector<1x8x8xbf16>, vector<1x8x8xf32> -> vector<1x8x8xf32>
    "tpu.trace_stop"() : () -> ()
    %88 = vector.extract_strided_slice %39 {offsets = [0, 0, 24], sizes = [1, 8, 8], strides = [1, 1, 1]} : vector<1x8x96xbf16> to vector<1x8x8xbf16>
    %89 = vector.extract_strided_slice %39 {offsets = [0, 0, 56], sizes = [1, 8, 8], strides = [1, 1, 1]} : vector<1x8x96xbf16> to vector<1x8x8xbf16>
    %90 = vector.extract_strided_slice %39 {offsets = [0, 0, 88], sizes = [1, 8, 8], strides = [1, 1, 1]} : vector<1x8x96xbf16> to vector<1x8x8xbf16>
    "tpu.trace_start"() <{level = 10 : i32, message = "nld,nmd->nlm"}> : () -> ()
    %cst_31 = arith.constant dense<0.000000e+00> : vector<1x8x8xf32>
    %91 = tpu.matmul %88, %89, %cst_31 {dimension_numbers = #tpu.dot_dimension_numbers<[2], [2], [1], [1], [0, 0, 0, 1, 1, 1], [0], [0]>} : vector<1x8x8xbf16>, vector<1x8x8xbf16>, vector<1x8x8xf32> -> vector<1x8x8xf32>
    "tpu.trace_stop"() : () -> ()
    %cst_32 = arith.constant dense<0xFF800000> : vector<1x8xf32>
    %92 = vector.multi_reduction <maximumf>, %91, %cst_32 [2] : vector<1x8x8xf32> to vector<1x8xf32>
    %93 = vector.shape_cast %92 : vector<1x8xf32> to vector<1x8x1xf32>
    %94 = vector.broadcast %93 : vector<1x8x1xf32> to vector<1x8x8xf32>
    %95 = arith.subf %91, %94 : vector<1x8x8xf32>
    %96 = math.exp %95 : vector<1x8x8xf32>
    %cst_33 = arith.constant dense<0.000000e+00> : vector<1x8xf32>
    %97 = vector.multi_reduction <add>, %96, %cst_33 [2] : vector<1x8x8xf32> to vector<1x8xf32>
    %98 = vector.shape_cast %97 : vector<1x8xf32> to vector<1x8x1xf32>
    %99 = tpu.reciprocal %98 {approx = true} : vector<1x8x1xf32> -> vector<1x8x1xf32>
    %100 = vector.broadcast %99 : vector<1x8x1xf32> to vector<1x8x8xf32>
    %101 = arith.mulf %96, %100 : vector<1x8x8xf32>
    %102 = arith.truncf %101 : vector<1x8x8xf32> to vector<1x8x8xbf16>
    "tpu.trace_start"() <{level = 10 : i32, message = "nlm,nmd->nld"}> : () -> ()
    %cst_34 = arith.constant dense<0.000000e+00> : vector<1x8x8xf32>
    %103 = tpu.matmul %102, %90, %cst_34 {dimension_numbers = #tpu.dot_dimension_numbers<[2], [1], [1], [2], [0, 0, 0, 1, 1, 2], [0], [0]>} : vector<1x8x8xbf16>, vector<1x8x8xbf16>, vector<1x8x8xf32> -> vector<1x8x8xf32>
    "tpu.trace_stop"() : () -> ()
    %104 = tpu.concatenate %55, %71, %87, %103 in 2 : vector<1x8x8xf32>, vector<1x8x8xf32>, vector<1x8x8xf32>, vector<1x8x8xf32> -> vector<1x8x32xf32>
    %105 = vector.shape_cast %104 : vector<1x8x32xf32> to vector<8x32xf32>
    %106 = arith.truncf %105 : vector<8x32xf32> to vector<8x32xbf16>
    %c0_35 = arith.constant 0 : index
    %c0_36 = arith.constant 0 : index
    %c0_37 = arith.constant 0 : index
    %107 = vector.load %arg7[%c0_35, %c0_36, %c0_37] : memref<1x32x32xbf16, #tpu.memory_space<vmem>>, vector<1x32x32xbf16>
    %108 = vector.shape_cast %107 : vector<1x32x32xbf16> to vector<32x32xbf16>
    %cst_38 = arith.constant dense<0.000000e+00> : vector<8x32xf32>
    %109 = tpu.matmul %106, %108, %cst_38 {dimension_numbers = #tpu.dot_dimension_numbers<[1], [0], [0], [1], [0, 0, 1, 1], [], []>} : vector<8x32xbf16>, vector<32x32xbf16>, vector<8x32xf32> -> vector<8x32xf32>
    %c0_39 = arith.constant 0 : index
    %c0_40 = arith.constant 0 : index
    %c0_41 = arith.constant 0 : index
    %110 = vector.load %arg8[%c0_39, %c0_40, %c0_41] : memref<1x1x32xf32, #tpu.memory_space<vmem>>, vector<1x1x32xf32>
    %111 = vector.shape_cast %110 : vector<1x1x32xf32> to vector<1x32xf32>
    %112 = vector.broadcast %111 : vector<1x32xf32> to vector<8x32xf32>
    %113 = arith.addf %109, %112 : vector<8x32xf32>
    %114 = arith.addf %3, %113 : vector<8x32xf32>
    %c0_42 = arith.constant 0 : index
    %c0_43 = arith.constant 0 : index
    %c0_44 = arith.constant 0 : index
    %115 = vector.load %arg9[%c0_42, %c0_43, %c0_44] : memref<1x1x32xf32, #tpu.memory_space<vmem>>, vector<1x1x32xf32>
    %116 = vector.shape_cast %115 : vector<1x1x32xf32> to vector<1x32xf32>
    %c0_45 = arith.constant 0 : index
    %c0_46 = arith.constant 0 : index
    %c0_47 = arith.constant 0 : index
    %117 = vector.load %arg10[%c0_45, %c0_46, %c0_47] : memref<1x1x32xf32, #tpu.memory_space<vmem>>, vector<1x1x32xf32>
    %118 = vector.shape_cast %117 : vector<1x1x32xf32> to vector<1x32xf32>
    %c0_48 = arith.constant 0 : index
    %c0_49 = arith.constant 0 : index
    %c0_50 = arith.constant 0 : index
    %119 = vector.load %arg11[%c0_48, %c0_49, %c0_50] : memref<1x32x128xbf16, #tpu.memory_space<vmem>>, vector<1x32x128xbf16>
    %120 = vector.shape_cast %119 : vector<1x32x128xbf16> to vector<32x128xbf16>
    %c0_51 = arith.constant 0 : index
    %c0_52 = arith.constant 0 : index
    %c0_53 = arith.constant 0 : index
    %121 = vector.load %arg12[%c0_51, %c0_52, %c0_53] : memref<1x1x128xf32, #tpu.memory_space<vmem>>, vector<1x1x128xf32>
    %122 = vector.shape_cast %121 : vector<1x1x128xf32> to vector<1x128xf32>
    %c0_54 = arith.constant 0 : index
    %c0_55 = arith.constant 0 : index
    %c0_56 = arith.constant 0 : index
    %123 = vector.load %arg13[%c0_54, %c0_55, %c0_56] : memref<1x128x32xbf16, #tpu.memory_space<vmem>>, vector<1x128x32xbf16>
    %124 = vector.shape_cast %123 : vector<1x128x32xbf16> to vector<128x32xbf16>
    %c0_57 = arith.constant 0 : index
    %c0_58 = arith.constant 0 : index
    %c0_59 = arith.constant 0 : index
    %125 = vector.load %arg14[%c0_57, %c0_58, %c0_59] : memref<1x1x32xf32, #tpu.memory_space<vmem>>, vector<1x1x32xf32>
    %126 = vector.shape_cast %125 : vector<1x1x32xf32> to vector<1x32xf32>
    %cst_60 = arith.constant dense<0.000000e+00> : vector<8xf32>
    %127 = vector.multi_reduction <add>, %114, %cst_60 [1] : vector<8x32xf32> to vector<8xf32>
    %128 = vector.shape_cast %127 : vector<8xf32> to vector<8x1xf32>
    %cst_61 = arith.constant 3.200000e+01 : f32
    %129 = vector.broadcast %cst_61 : f32 to vector<8x1xf32>
    %130 = arith.divf %128, %129 : vector<8x1xf32>
    %131 = vector.broadcast %130 : vector<8x1xf32> to vector<8x32xf32>
    %132 = arith.subf %114, %131 : vector<8x32xf32>
    %133 = arith.mulf %132, %132 : vector<8x32xf32>
    %cst_62 = arith.constant dense<0.000000e+00> : vector<8xf32>
    %134 = vector.multi_reduction <add>, %133, %cst_62 [1] : vector<8x32xf32> to vector<8xf32>
    %135 = vector.shape_cast %134 : vector<8xf32> to vector<8x1xf32>
    %cst_63 = arith.constant 3.200000e+01 : f32
    %136 = vector.broadcast %cst_63 : f32 to vector<8x1xf32>
    %137 = arith.divf %135, %136 : vector<8x1xf32>
    %138 = vector.broadcast %130 : vector<8x1xf32> to vector<8x32xf32>
    %139 = arith.subf %114, %138 : vector<8x32xf32>
    %cst_64 = arith.constant 9.99999974E-6 : f32
    %140 = vector.broadcast %cst_64 : f32 to vector<8x1xf32>
    %141 = arith.addf %137, %140 : vector<8x1xf32>
    %142 = math.rsqrt %141 : vector<8x1xf32>
    %143 = vector.broadcast %142 : vector<8x1xf32> to vector<8x32xf32>
    %144 = arith.mulf %139, %143 : vector<8x32xf32>
    %145 = vector.broadcast %116 : vector<1x32xf32> to vector<8x32xf32>
    %146 = arith.mulf %144, %145 : vector<8x32xf32>
    %147 = vector.broadcast %118 : vector<1x32xf32> to vector<8x32xf32>
    %148 = arith.addf %146, %147 : vector<8x32xf32>
    %149 = arith.truncf %148 : vector<8x32xf32> to vector<8x32xbf16>
    %cst_65 = arith.constant dense<0.000000e+00> : vector<8x128xf32>
    %150 = tpu.matmul %149, %120, %cst_65 {dimension_numbers = #tpu.dot_dimension_numbers<[1], [0], [0], [1], [0, 0, 1, 1], [], []>} : vector<8x32xbf16>, vector<32x128xbf16>, vector<8x128xf32> -> vector<8x128xf32>
    %151 = vector.broadcast %122 : vector<1x128xf32> to vector<8x128xf32>
    %152 = arith.addf %150, %151 : vector<8x128xf32>
    %cst_66 = arith.constant 1.702000e+00 : f32
    %153 = vector.broadcast %cst_66 : f32 to vector<8x128xf32>
    %154 = arith.mulf %153, %152 : vector<8x128xf32>
    %155 = arith.negf %154 : vector<8x128xf32>
    %156 = math.exp %155 : vector<8x128xf32>
    %cst_67 = arith.constant 1.000000e+00 : f32
    %157 = vector.broadcast %cst_67 : f32 to vector<8x128xf32>
    %158 = arith.addf %157, %156 : vector<8x128xf32>
    %159 = arith.divf %157, %158 : vector<8x128xf32>
    %160 = arith.mulf %152, %159 : vector<8x128xf32>
    %161 = arith.truncf %160 : vector<8x128xf32> to vector<8x128xbf16>
    %cst_68 = arith.constant dense<0.000000e+00> : vector<8x32xf32>
    %162 = tpu.matmul %161, %124, %cst_68 {dimension_numbers = #tpu.dot_dimension_numbers<[1], [0], [0], [1], [0, 0, 1, 1], [], []>} : vector<8x128xbf16>, vector<128x32xbf16>, vector<8x32xf32> -> vector<8x32xf32>
    %163 = vector.broadcast %126 : vector<1x32xf32> to vector<8x32xf32>
    %164 = arith.addf %162, %163 : vector<8x32xf32>
    %165 = arith.addf %114, %164 : vector<8x32xf32>
    %c0_69 = arith.constant 0 : index
    %c0_70 = arith.constant 0 : index
    %166 = vector.load %arg15[%c0_69, %c0_70] : memref<8x32xf32, #tpu.memory_space<vmem>>, vector<8x32xf32>
    tpu.vector_store %arg15[%c0_69, %c0_70], %165 {strides = array<i32>} : memref<8x32xf32, #tpu.memory_space<vmem>>, vector<8x32xf32>,
    return
  }
  func.func @transform_0(%arg0: i32, %arg1: i32) -> (i32, i32) {
    %c0_i32 = arith.constant 0 : i32
    %c0_i32_0 = arith.constant 0 : i32
    return %arg0, %c0_i32 : i32, i32
  }
  func.func @transform_1(%arg0: i32, %arg1: i32) -> (i32, i32, i32) {
    %c0_i32 = arith.constant 0 : i32
    %c0_i32_0 = arith.constant 0 : i32
    %c0_i32_1 = arith.constant 0 : i32
    return %arg1, %c0_i32, %c0_i32_0 : i32, i32, i32
  }
  func.func @transform_2(%arg0: i32, %arg1: i32) -> (i32, i32, i32) {
    %c0_i32 = arith.constant 0 : i32
    %c0_i32_0 = arith.constant 0 : i32
    %c0_i32_1 = arith.constant 0 : i32
    return %arg1, %c0_i32, %c0_i32_0 : i32, i32, i32
  }
  func.func @transform_3(%arg0: i32, %arg1: i32) -> (i32, i32, i32) {
    %c0_i32 = arith.constant 0 : i32
    %c0_i32_0 = arith.constant 0 : i32
    %c0_i32_1 = arith.constant 0 : i32
    return %arg1, %c0_i32, %c0_i32_0 : i32, i32, i32
  }
  func.func @transform_4(%arg0: i32, %arg1: i32) -> (i32, i32, i32) {
    %c0_i32 = arith.constant 0 : i32
    %c0_i32_0 = arith.constant 0 : i32
    %c0_i32_1 = arith.constant 0 : i32
    return %arg1, %c0_i32, %c0_i32_0 : i32, i32, i32
  }
  func.func @transform_5(%arg0: i32, %arg1: i32) -> (i32, i32, i32) {
    %c0_i32 = arith.constant 0 : i32
    %c0_i32_0 = arith.constant 0 : i32
    %c0_i32_1 = arith.constant 0 : i32
    return %arg1, %c0_i32, %c0_i32_0 : i32, i32, i32
  }
  func.func @transform_6(%arg0: i32, %arg1: i32) -> (i32, i32, i32) {
    %c0_i32 = arith.constant 0 : i32
    %c0_i32_0 = arith.constant 0 : i32
    %c0_i32_1 = arith.constant 0 : i32
    return %arg1, %c0_i32, %c0_i32_0 : i32, i32, i32
  }
  func.func @transform_7(%arg0: i32, %arg1: i32) -> (i32, i32, i32) {
    %c0_i32 = arith.constant 0 : i32
    %c0_i32_0 = arith.constant 0 : i32
    %c0_i32_1 = arith.constant 0 : i32
    return %arg1, %c0_i32, %c0_i32_0 : i32, i32, i32
  }
  func.func @transform_8(%arg0: i32, %arg1: i32) -> (i32, i32, i32) {
    %c0_i32 = arith.constant 0 : i32
    %c0_i32_0 = arith.constant 0 : i32
    %c0_i32_1 = arith.constant 0 : i32
    return %arg1, %c0_i32, %c0_i32_0 : i32, i32, i32
  }
  func.func @transform_9(%arg0: i32, %arg1: i32) -> (i32, i32, i32) {
    %c0_i32 = arith.constant 0 : i32
    %c0_i32_0 = arith.constant 0 : i32
    %c0_i32_1 = arith.constant 0 : i32
    return %arg1, %c0_i32, %c0_i32_0 : i32, i32, i32
  }
  func.func @transform_10(%arg0: i32, %arg1: i32) -> (i32, i32, i32) {
    %c0_i32 = arith.constant 0 : i32
    %c0_i32_0 = arith.constant 0 : i32
    %c0_i32_1 = arith.constant 0 : i32
    return %arg1, %c0_i32, %c0_i32_0 : i32, i32, i32
  }
  func.func @transform_11(%arg0: i32, %arg1: i32) -> (i32, i32, i32) {
    %c0_i32 = arith.constant 0 : i32
    %c0_i32_0 = arith.constant 0 : i32
    %c0_i32_1 = arith.constant 0 : i32
    return %arg1, %c0_i32, %c0_i32_0 : i32, i32, i32
  }
  func.func @transform_12(%arg0: i32, %arg1: i32) -> (i32, i32, i32) {
    %c0_i32 = arith.constant 0 : i32
    %c0_i32_0 = arith.constant 0 : i32
    %c0_i32_1 = arith.constant 0 : i32
    return %arg1, %c0_i32, %c0_i32_0 : i32, i32, i32
  }
  func.func @transform_13(%arg0: i32, %arg1: i32) -> (i32, i32) {
    %c0_i32 = arith.constant 0 : i32
    %c0_i32_0 = arith.constant 0 : i32
    return %arg0, %c0_i32 : i32, i32
  }
}

</mosaic_0001>

<llo_original>
// kernel: tpu_custom_call.1
$region0: #{tpu_custom_call.1}
  #allocation0 [shape = 'u32[]', space=smem, size = 0x4, offset = 0x4, fixed_abs, tag = 'smem constant byte address 0x4 - core index']
  #allocation1 [shape = 'u32[144,128]{1,0:T(1,128)}', space=vmem, size = 0x12000, scoped, tag = 'internal scratch']
  %s0 = inlined_call_operand.hbm [shape: f32[16,32], index: 0, kind: input, shape index: {}, may-alias: {0,13}]
  %s1 = inlined_call_operand.vmem [shape: f32[2,1,32], index: 1, kind: input, shape index: {}]
  %s2 = inlined_call_operand.vmem [shape: f32[2,1,32], index: 2, kind: input, shape index: {}]
  %s3 = inlined_call_operand.vmem [shape: bf16[2,32,96], index: 3, kind: input, shape index: {}]
  %s4 = inlined_call_operand.vmem [shape: f32[2,1,96], index: 4, kind: input, shape index: {}]
  %s5 = inlined_call_operand.vmem [shape: bf16[2,32,32], index: 5, kind: input, shape index: {}]
  %s6 = inlined_call_operand.vmem [shape: f32[2,1,32], index: 6, kind: input, shape index: {}]
  %s7 = inlined_call_operand.vmem [shape: f32[2,1,32], index: 7, kind: input, shape index: {}]
  %s8 = inlined_call_operand.vmem [shape: f32[2,1,32], index: 8, kind: input, shape index: {}]
  %s9 = inlined_call_operand.vmem [shape: bf16[2,32,128], index: 9, kind: input, shape index: {}]
  %s10 = inlined_call_operand.vmem [shape: f32[2,1,128], index: 10, kind: input, shape index: {}]
  %s11 = inlined_call_operand.vmem [shape: bf16[2,128,32], index: 11, kind: input, shape index: {}]
  %s12 = inlined_call_operand.vmem [shape: f32[2,1,32], index: 12, kind: input, shape index: {}]
  %s13 = inlined_call_operand.hbm [shape: f32[16,32], index: 13, kind: output, shape index: {}, may-alias: {0,13}]
  %s14 = sld [smem:[#allocation0]]
  $region93: #{tpu_custom_call.1} parent=0
    _
  %s16 = ssub.s32 1, %s14
  %s17 = scalar_select 0, %s16, %s14
  $region1: #{tpu_custom_call.1} parent=0
    #allocation2 [shape = 'u8[8192]{0}', space=vmem, size = 0x2000, scoped, tag = 'input window, operand 0']
    #allocation3 [shape = 's32[2]{0}', space=sflag, size = 0x8, scoped, tag = 'scoped memory for tpu_custom_call.1']
    #allocation4 [shape = 's32[2]{0}', space=sflag, size = 0x8, scoped, tag = 'scoped memory for tpu_custom_call.1']
    #allocation5 [shape = 'u8[8192]{0}', space=vmem, size = 0x2000, scoped, tag = 'output window, operand 0']
    %18 = vsyncpa [#allocation3], 0
    %s19 = scalar_lea.sflag [#allocation3], 1
    %20 = vsyncpa %s19, 0
    %21 = vsyncpa [#allocation4], 0
    %s22 = scalar_lea.sflag [#allocation4], 1
    %23 = vsyncpa %s22, 0
    loop: start=0, step=1, limit=6
    $region2: #{tpu_custom_call.1} parent=1 // loop_pre_header
      _
    $region3: #{tpu_custom_call.1} parent=1 // loop_header
      %s25 = sphi 0, %s29
      %p26 = scmp.ge.s32.totalorder %s25, 6
      %s32 = sphi 0, %s44
      %s33 = sphi 0, %s40
      %s34 = sphi 0, %s32
      %s35 = sphi 0, %s33
      %s36 = sphi 0, %s34
      %s37 = sphi 0, %s35
      %s47 = sphi 0, %s49
      %s50 = sphi 0, %s47
      %s51 = sphi 0, %s50
      %s67 = sphi 0, %s51
      %s73 = sphi 0, %s75
      %s76 = sphi 0, %s73
      %s77 = sphi 0, %s76
      %s93 = sphi 0, %s77
      %s99 = sphi 0, %s101
      %s102 = sphi 0, %s99
      %s103 = sphi 0, %s102
      %s119 = sphi 0, %s103
      %s125 = sphi 0, %s127
      %s128 = sphi 0, %s125
      %s129 = sphi 0, %s128
      %s145 = sphi 0, %s129
      %s151 = sphi 0, %s153
      %s154 = sphi 0, %s151
      %s155 = sphi 0, %s154
      %s171 = sphi 0, %s155
      %s177 = sphi 0, %s179
      %s180 = sphi 0, %s177
      %s181 = sphi 0, %s180
      %s197 = sphi 0, %s181
      %s203 = sphi 0, %s205
      %s206 = sphi 0, %s203
      %s207 = sphi 0, %s206
      %s223 = sphi 0, %s207
      %s229 = sphi 0, %s231
      %s232 = sphi 0, %s229
      %s233 = sphi 0, %s232
      %s249 = sphi 0, %s233
      %s255 = sphi 0, %s257
      %s258 = sphi 0, %s255
      %s259 = sphi 0, %s258
      %s275 = sphi 0, %s259
      %s281 = sphi 0, %s283
      %s284 = sphi 0, %s281
      %s285 = sphi 0, %s284
      %s301 = sphi 0, %s285
      %s307 = sphi 0, %s309
      %s310 = sphi 0, %s307
      %s311 = sphi 0, %s310
      %s327 = sphi 0, %s311
      %s333 = sphi 0, %s335
      %s336 = sphi 0, %s333
      %s337 = sphi 0, %s336
      %s353 = sphi 0, %s337
      %s359 = sphi 0, %s361
      %s362 = sphi 0, %s359
      %s363 = sphi 0, %s362
      %s379 = sphi 0, %s363
      %s385 = sphi 0, %s387
      %s388 = sphi 0, %s385
      %s389 = sphi 0, %s388
      %s405 = sphi 0, %s389
    $region4: #{tpu_custom_call.1} parent=1 // loop_header_branch
      %28 = sbr.rel (%p26) target = $region8
    $region5: #{tpu_custom_call.1} parent=1 // loop_body
      %s30 = ssub.s32 %s25, 1
      %s31 = ssub.s32 %s25, 2
      %s38 = sadd.s32 1, %s33
      %p39 = scmp.ge.s32.totalorder %s38, 2
      %s40 = scalar_select %p39, 0, %s38
      %s41 = sadd.s32 1, %s32
      %s42 = scalar_select %p39, %s41, %s32
      %p43 = scmp.ge.s32.totalorder %s42, 2
      %s44 = scalar_select %p43, 0, %s42
      %s45 = ssub.s32 %s32, %s44
      %p46 = scmp.eq.s32.totalorder %s45, 0
      %s48 = sadd.s32 %s47, 1
      %s49 = scalar_select %p46, %s47, %s48
      %p52 = pneg %p46
      %p53 = scmp.eq.s32.totalorder %s25, 3
      %p54 = por %p52, %p53
      %p55 = scmp.ne.s32.totalorder %s47, %s50
      %p56 = scmp.eq.s32.totalorder %s25, 0
      %p57 = por %p55, %p56
      %p58 = scmp.ne.s32.totalorder %s47, %s50
      %p59 = scmp.eq.s32.totalorder %s30, 3
      %p60 = por %p58, %p59
      %p61 = scmp.ne.s32.totalorder %s50, %s51
      %p62 = scmp.eq.s32.totalorder %s30, 0
      %p63 = por %p61, %p62
      %p64 = scmp.ne.s32.totalorder %s50, %s51
      %p65 = scmp.eq.s32.totalorder %s31, 3
      %p66 = por %p64, %p65
      %p68 = scmp.ne.s32.totalorder %s51, %s67
      %p69 = scmp.eq.s32.totalorder %s31, 0
      %p70 = por %p68, %p69
      %s71 = ssub.s32 %s33, %s40
      %p72 = scmp.eq.s32.totalorder %s71, 0
      %s74 = sadd.s32 %s73, 1
      %s75 = scalar_select %p72, %s73, %s74
      %p78 = pneg %p72
      %p79 = scmp.eq.s32.totalorder %s25, 3
      %p80 = por %p78, %p79
      %p81 = scmp.ne.s32.totalorder %s73, %s76
      %p82 = scmp.eq.s32.totalorder %s25, 0
      %p83 = por %p81, %p82
      %p84 = scmp.ne.s32.totalorder %s73, %s76
      %p85 = scmp.eq.s32.totalorder %s30, 3
      %p86 = por %p84, %p85
      %p87 = scmp.ne.s32.totalorder %s76, %s77
      %p88 = scmp.eq.s32.totalorder %s30, 0
      %p89 = por %p87, %p88
      %p90 = scmp.ne.s32.totalorder %s76, %s77
      %p91 = scmp.eq.s32.totalorder %s31, 3
      %p92 = por %p90, %p91
      %p94 = scmp.ne.s32.totalorder %s77, %s93
      %p95 = scmp.eq.s32.totalorder %s31, 0
      %p96 = por %p94, %p95
      %s97 = ssub.s32 %s33, %s40
      %p98 = scmp.eq.s32.totalorder %s97, 0
      %s100 = sadd.s32 %s99, 1
      %s101 = scalar_select %p98, %s99, %s100
      %p104 = pneg %p98
      %p105 = scmp.eq.s32.totalorder %s25, 3
      %p106 = por %p104, %p105
      %p107 = scmp.ne.s32.totalorder %s99, %s102
      %p108 = scmp.eq.s32.totalorder %s25, 0
      %p109 = por %p107, %p108
      %p110 = scmp.ne.s32.totalorder %s99, %s102
      %p111 = scmp.eq.s32.totalorder %s30, 3
      %p112 = por %p110, %p111
      %p113 = scmp.ne.s32.totalorder %s102, %s103
      %p114 = scmp.eq.s32.totalorder %s30, 0
      %p115 = por %p113, %p114
      %p116 = scmp.ne.s32.totalorder %s102, %s103
      %p117 = scmp.eq.s32.totalorder %s31, 3
      %p118 = por %p116, %p117
      %p120 = scmp.ne.s32.totalorder %s103, %s119
      %p121 = scmp.eq.s32.totalorder %s31, 0
      %p122 = por %p120, %p121
      %s123 = ssub.s32 %s33, %s40
      %p124 = scmp.eq.s32.totalorder %s123, 0
      %s126 = sadd.s32 %s125, 1
      %s127 = scalar_select %p124, %s125, %s126
      %p130 = pneg %p124
      %p131 = scmp.eq.s32.totalorder %s25, 3
      %p132 = por %p130, %p131
      %p133 = scmp.ne.s32.totalorder %s125, %s128
      %p134 = scmp.eq.s32.totalorder %s25, 0
      %p135 = por %p133, %p134
      %p136 = scmp.ne.s32.totalorder %s125, %s128
      %p137 = scmp.eq.s32.totalorder %s30, 3
      %p138 = por %p136, %p137
      %p139 = scmp.ne.s32.totalorder %s128, %s129
      %p140 = scmp.eq.s32.totalorder %s30, 0
      %p141 = por %p139, %p140
      %p142 = scmp.ne.s32.totalorder %s128, %s129
      %p143 = scmp.eq.s32.totalorder %s31, 3
      %p144 = por %p142, %p143
      %p146 = scmp.ne.s32.totalorder %s129, %s145
      %p147 = scmp.eq.s32.totalorder %s31, 0
      %p148 = por %p146, %p147
      %s149 = ssub.s32 %s33, %s40
      %p150 = scmp.eq.s32.totalorder %s149, 0
      %s152 = sadd.s32 %s151, 1
      %s153 = scalar_select %p150, %s151, %s152
      %p156 = pneg %p150
      %p157 = scmp.eq.s32.totalorder %s25, 3
      %p158 = por %p156, %p157
      %p159 = scmp.ne.s32.totalorder %s151, %s154
      %p160 = scmp.eq.s32.totalorder %s25, 0
      %p161 = por %p159, %p160
      %p162 = scmp.ne.s32.totalorder %s151, %s154
      %p163 = scmp.eq.s32.totalorder %s30, 3
      %p164 = por %p162, %p163
      %p165 = scmp.ne.s32.totalorder %s154, %s155
      %p166 = scmp.eq.s32.totalorder %s30, 0
      %p167 = por %p165, %p166
      %p168 = scmp.ne.s32.totalorder %s154, %s155
      %p169 = scmp.eq.s32.totalorder %s31, 3
      %p170 = por %p168, %p169
      %p172 = scmp.ne.s32.totalorder %s155, %s171
      %p173 = scmp.eq.s32.totalorder %s31, 0
      %p174 = por %p172, %p173
      %s175 = ssub.s32 %s33, %s40
      %p176 = scmp.eq.s32.totalorder %s175, 0
      %s178 = sadd.s32 %s177, 1
      %s179 = scalar_select %p176, %s177, %s178
      %p182 = pneg %p176
      %p183 = scmp.eq.s32.totalorder %s25, 3
      %p184 = por %p182, %p183
      %p185 = scmp.ne.s32.totalorder %s177, %s180
      %p186 = scmp.eq.s32.totalorder %s25, 0
      %p187 = por %p185, %p186
      %p188 = scmp.ne.s32.totalorder %s177, %s180
      %p189 = scmp.eq.s32.totalorder %s30, 3
      %p190 = por %p188, %p189
      %p191 = scmp.ne.s32.totalorder %s180, %s181
      %p192 = scmp.eq.s32.totalorder %s30, 0
      %p193 = por %p191, %p192
      %p194 = scmp.ne.s32.totalorder %s180, %s181
      %p195 = scmp.eq.s32.totalorder %s31, 3
      %p196 = por %p194, %p195
      %p198 = scmp.ne.s32.totalorder %s181, %s197
      %p199 = scmp.eq.s32.totalorder %s31, 0
      %p200 = por %p198, %p199
      %s201 = ssub.s32 %s33, %s40
      %p202 = scmp.eq.s32.totalorder %s201, 0
      %s204 = sadd.s32 %s203, 1
      %s205 = scalar_select %p202, %s203, %s204
      %p208 = pneg %p202
      %p209 = scmp.eq.s32.totalorder %s25, 3
      %p210 = por %p208, %p209
      %p211 = scmp.ne.s32.totalorder %s203, %s206
      %p212 = scmp.eq.s32.totalorder %s25, 0
      %p213 = por %p211, %p212
      %p214 = scmp.ne.s32.totalorder %s203, %s206
      %p215 = scmp.eq.s32.totalorder %s30, 3
      %p216 = por %p214, %p215
      %p217 = scmp.ne.s32.totalorder %s206, %s207
      %p218 = scmp.eq.s32.totalorder %s30, 0
      %p219 = por %p217, %p218
      %p220 = scmp.ne.s32.totalorder %s206, %s207
      %p221 = scmp.eq.s32.totalorder %s31, 3
      %p222 = por %p220, %p221
      %p224 = scmp.ne.s32.totalorder %s207, %s223
      %p225 = scmp.eq.s32.totalorder %s31, 0
      %p226 = por %p224, %p225
      %s227 = ssub.s32 %s33, %s40
      %p228 = scmp.eq.s32.totalorder %s227, 0
      %s230 = sadd.s32 %s229, 1
      %s231 = scalar_select %p228, %s229, %s230
      %p234 = pneg %p228
      %p235 = scmp.eq.s32.totalorder %s25, 3
      %p236 = por %p234, %p235
      %p237 = scmp.ne.s32.totalorder %s229, %s232
      %p238 = scmp.eq.s32.totalorder %s25, 0
      %p239 = por %p237, %p238
      %p240 = scmp.ne.s32.totalorder %s229, %s232
      %p241 = scmp.eq.s32.totalorder %s30, 3
      %p242 = por %p240, %p241
      %p243 = scmp.ne.s32.totalorder %s232, %s233
      %p244 = scmp.eq.s32.totalorder %s30, 0
      %p245 = por %p243, %p244
      %p246 = scmp.ne.s32.totalorder %s232, %s233
      %p247 = scmp.eq.s32.totalorder %s31, 3
      %p248 = por %p246, %p247
      %p250 = scmp.ne.s32.totalorder %s233, %s249
      %p251 = scmp.eq.s32.totalorder %s31, 0
      %p252 = por %p250, %p251
      %s253 = ssub.s32 %s33, %s40
      %p254 = scmp.eq.s32.totalorder %s253, 0
      %s256 = sadd.s32 %s255, 1
      %s257 = scalar_select %p254, %s255, %s256
      %p260 = pneg %p254
      %p261 = scmp.eq.s32.totalorder %s25, 3
      %p262 = por %p260, %p261
      %p263 = scmp.ne.s32.totalorder %s255, %s258
      %p264 = scmp.eq.s32.totalorder %s25, 0
      %p265 = por %p263, %p264
      %p266 = scmp.ne.s32.totalorder %s255, %s258
      %p267 = scmp.eq.s32.totalorder %s30, 3
      %p268 = por %p266, %p267
      %p269 = scmp.ne.s32.totalorder %s258, %s259
      %p270 = scmp.eq.s32.totalorder %s30, 0
      %p271 = por %p269, %p270
      %p272 = scmp.ne.s32.totalorder %s258, %s259
      %p273 = scmp.eq.s32.totalorder %s31, 3
      %p274 = por %p272, %p273
      %p276 = scmp.ne.s32.totalorder %s259, %s275
      %p277 = scmp.eq.s32.totalorder %s31, 0
      %p278 = por %p276, %p277
      %s279 = ssub.s32 %s33, %s40
      %p280 = scmp.eq.s32.totalorder %s279, 0
      %s282 = sadd.s32 %s281, 1
      %s283 = scalar_select %p280, %s281, %s282
      %p286 = pneg %p280
      %p287 = scmp.eq.s32.totalorder %s25, 3
      %p288 = por %p286, %p287
      %p289 = scmp.ne.s32.totalorder %s281, %s284
      %p290 = scmp.eq.s32.totalorder %s25, 0
      %p291 = por %p289, %p290
      %p292 = scmp.ne.s32.totalorder %s281, %s284
      %p293 = scmp.eq.s32.totalorder %s30, 3
      %p294 = por %p292, %p293
      %p295 = scmp.ne.s32.totalorder %s284, %s285
      %p296 = scmp.eq.s32.totalorder %s30, 0
      %p297 = por %p295, %p296
      %p298 = scmp.ne.s32.totalorder %s284, %s285
      %p299 = scmp.eq.s32.totalorder %s31, 3
      %p300 = por %p298, %p299
      %p302 = scmp.ne.s32.totalorder %s285, %s301
      %p303 = scmp.eq.s32.totalorder %s31, 0
      %p304 = por %p302, %p303
      %s305 = ssub.s32 %s33, %s40
      %p306 = scmp.eq.s32.totalorder %s305, 0
      %s308 = sadd.s32 %s307, 1
      %s309 = scalar_select %p306, %s307, %s308
      %p312 = pneg %p306
      %p313 = scmp.eq.s32.totalorder %s25, 3
      %p314 = por %p312, %p313
      %p315 = scmp.ne.s32.totalorder %s307, %s310
      %p316 = scmp.eq.s32.totalorder %s25, 0
      %p317 = por %p315, %p316
      %p318 = scmp.ne.s32.totalorder %s307, %s310
      %p319 = scmp.eq.s32.totalorder %s30, 3
      %p320 = por %p318, %p319
      %p321 = scmp.ne.s32.totalorder %s310, %s311
      %p322 = scmp.eq.s32.totalorder %s30, 0
      %p323 = por %p321, %p322
      %p324 = scmp.ne.s32.totalorder %s310, %s311
      %p325 = scmp.eq.s32.totalorder %s31, 3
      %p326 = por %p324, %p325
      %p328 = scmp.ne.s32.totalorder %s311, %s327
      %p329 = scmp.eq.s32.totalorder %s31, 0
      %p330 = por %p328, %p329
      %s331 = ssub.s32 %s33, %s40
      %p332 = scmp.eq.s32.totalorder %s331, 0
      %s334 = sadd.s32 %s333, 1
      %s335 = scalar_select %p332, %s333, %s334
      %p338 = pneg %p332
      %p339 = scmp.eq.s32.totalorder %s25, 3
      %p340 = por %p338, %p339
      %p341 = scmp.ne.s32.totalorder %s333, %s336
      %p342 = scmp.eq.s32.totalorder %s25, 0
      %p343 = por %p341, %p342
      %p344 = scmp.ne.s32.totalorder %s333, %s336
      %p345 = scmp.eq.s32.totalorder %s30, 3
      %p346 = por %p344, %p345
      %p347 = scmp.ne.s32.totalorder %s336, %s337
      %p348 = scmp.eq.s32.totalorder %s30, 0
      %p349 = por %p347, %p348
      %p350 = scmp.ne.s32.totalorder %s336, %s337
      %p351 = scmp.eq.s32.totalorder %s31, 3
      %p352 = por %p350, %p351
      %p354 = scmp.ne.s32.totalorder %s337, %s353
      %p355 = scmp.eq.s32.totalorder %s31, 0
      %p356 = por %p354, %p355
      %s357 = ssub.s32 %s33, %s40
      %p358 = scmp.eq.s32.totalorder %s357, 0
      %s360 = sadd.s32 %s359, 1
      %s361 = scalar_select %p358, %s359, %s360
      %p364 = pneg %p358
      %p365 = scmp.eq.s32.totalorder %s25, 3
      %p366 = por %p364, %p365
      %p367 = scmp.ne.s32.totalorder %s359, %s362
      %p368 = scmp.eq.s32.totalorder %s25, 0
      %p369 = por %p367, %p368
      %p370 = scmp.ne.s32.totalorder %s359, %s362
      %p371 = scmp.eq.s32.totalorder %s30, 3
      %p372 = por %p370, %p371
      %p373 = scmp.ne.s32.totalorder %s362, %s363
      %p374 = scmp.eq.s32.totalorder %s30, 0
      %p375 = por %p373, %p374
      %p376 = scmp.ne.s32.totalorder %s362, %s363
      %p377 = scmp.eq.s32.totalorder %s31, 3
      %p378 = por %p376, %p377
      %p380 = scmp.ne.s32.totalorder %s363, %s379
      %p381 = scmp.eq.s32.totalorder %s31, 0
      %p382 = por %p380, %p381
      %s383 = ssub.s32 %s32, %s44
      %p384 = scmp.eq.s32.totalorder %s383, 0
      %s386 = sadd.s32 %s385, 1
      %s387 = scalar_select %p384, %s385, %s386
      %p390 = pneg %p384
      %p391 = scmp.eq.s32.totalorder %s25, 3
      %p392 = por %p390, %p391
      %p393 = scmp.ne.s32.totalorder %s385, %s388
      %p394 = scmp.eq.s32.totalorder %s25, 0
      %p395 = por %p393, %p394
      %p396 = scmp.ne.s32.totalorder %s385, %s388
      %p397 = scmp.eq.s32.totalorder %s30, 3
      %p398 = por %p396, %p397
      %p399 = scmp.ne.s32.totalorder %s388, %s389
      %p400 = scmp.eq.s32.totalorder %s30, 0
      %p401 = por %p399, %p400
      %p402 = scmp.ne.s32.totalorder %s388, %s389
      %p403 = scmp.eq.s32.totalorder %s31, 3
      %p404 = por %p402, %p403
      %p406 = scmp.ne.s32.totalorder %s389, %s405
      %p407 = scmp.eq.s32.totalorder %s31, 0
      %p408 = por %p406, %p407
      %p409 = scmp.le.s32.totalorder 1, %s25
      %p410 = scmp.lt.s32.totalorder %s25, 5
      %p411 = pnand %p409, %p410
      %p412 = pneg %p411
      // Predicated region
      $region9: #{tpu_custom_call.1} parent=5 // pred_check
        _
      $region10: #{tpu_custom_call.1} parent=5 // pred_check_branch
        %414 = sbr.rel (%p411) target = $region12
      $region11: #{tpu_custom_call.1} parent=5 // pred_region
        %s415 = ssub.s32 %s25, 1
      $region12: #{tpu_custom_call.1} parent=5 // pred_fallthru
        _
      %p416 = scmp.lt.s32.totalorder %s25, 4
      // Predicated region
      $region13: #{tpu_custom_call.1} parent=5 // pred_check
        %p417 = pneg %p416
      $region14: #{tpu_custom_call.1} parent=5 // pred_check_branch
        %419 = sbr.rel (%p417) target = $region16
      $region15: #{tpu_custom_call.1} parent=5 // pred_region
        // Predicated region
        $region17: #{tpu_custom_call.1} parent=15 // pred_check
          %p420 = pneg %p57
        $region18: #{tpu_custom_call.1} parent=15 // pred_check_branch
          %422 = sbr.rel (%p420) target = $region20
        $region19: #{tpu_custom_call.1} parent=15 // pred_region
          %s423 = sand.u32 %s47, 1
          %s424 = scalar_lea.sflag [#allocation3], %s423
          %s425 = sand.u32 %s47, 1
          %s426 = smul.addr %s425, 8
          %s427 = scalar_lea.vmem [#allocation2], %s426
          %s429 = ssub.s32 128, 128
          %430 = vsyncadd %s424, %s429
          %s431 = smul.addr %s32, 128
          %s432 = scalar_lea.hbm %s0, %s431
          %s434 = sshll.u32 %s427, 4
          %s435 = int_to_ptr.vmem [resolvable:$true] %s434
          %437 = dma.hbm_to_vmem [thread:$0]  %s432, 128, %s435, %s424
        $region20: #{tpu_custom_call.1} parent=15 // pred_fallthru
          _
        // Predicated region
        $region21: #{tpu_custom_call.1} parent=15 // pred_check
          %p438 = pneg %p83
        $region22: #{tpu_custom_call.1} parent=15 // pred_check_branch
          %440 = sbr.rel (%p438) target = $region24
        $region23: #{tpu_custom_call.1} parent=15 // pred_region
          %p441 = scmp.lt.s32.totalorder %s33, 1
          %s442 = scalar_select %p441, %s33, 1
          %s443 = scalar_lea.vmem %s1, %s442
        $region24: #{tpu_custom_call.1} parent=15 // pred_fallthru
          _
        // Predicated region
        $region25: #{tpu_custom_call.1} parent=15 // pred_check
          %p444 = pneg %p109
        $region26: #{tpu_custom_call.1} parent=15 // pred_check_branch
          %446 = sbr.rel (%p444) target = $region28
        $region27: #{tpu_custom_call.1} parent=15 // pred_region
          %p447 = scmp.lt.s32.totalorder %s33, 1
          %s448 = scalar_select %p447, %s33, 1
          %s449 = scalar_lea.vmem %s2, %s448
        $region28: #{tpu_custom_call.1} parent=15 // pred_fallthru
          _
        // Predicated region
        $region29: #{tpu_custom_call.1} parent=15 // pred_check
          %p450 = pneg %p135
        $region30: #{tpu_custom_call.1} parent=15 // pred_check_branch
          %452 = sbr.rel (%p450) target = $region32
        $region31: #{tpu_custom_call.1} parent=15 // pred_region
          %p453 = scmp.lt.s32.totalorder %s33, 1
          %s454 = scalar_select %p453, %s33, 1
          %s455 = smul.addr %s454, 4
          %s456 = smul.addr %s455, 4
          %s457 = scalar_lea.vmem %s3, %s456
        $region32: #{tpu_custom_call.1} parent=15 // pred_fallthru
          _
        // Predicated region
        $region33: #{tpu_custom_call.1} parent=15 // pred_check
          %p458 = pneg %p161
        $region34: #{tpu_custom_call.1} parent=15 // pred_check_branch
          %460 = sbr.rel (%p458) target = $region36
        $region35: #{tpu_custom_call.1} parent=15 // pred_region
          %p461 = scmp.lt.s32.totalorder %s33, 1
          %s462 = scalar_select %p461, %s33, 1
          %s463 = scalar_lea.vmem %s4, %s462
        $region36: #{tpu_custom_call.1} parent=15 // pred_fallthru
          _
        // Predicated region
        $region37: #{tpu_custom_call.1} parent=15 // pred_check
          %p464 = pneg %p187
        $region38: #{tpu_custom_call.1} parent=15 // pred_check_branch
          %466 = sbr.rel (%p464) target = $region40
        $region39: #{tpu_custom_call.1} parent=15 // pred_region
          %p467 = scmp.lt.s32.totalorder %s33, 1
          %s468 = scalar_select %p467, %s33, 1
          %s469 = smul.addr %s468, 4
          %s470 = smul.addr %s469, 4
          %s471 = scalar_lea.vmem %s5, %s470
        $region40: #{tpu_custom_call.1} parent=15 // pred_fallthru
          _
        // Predicated region
        $region41: #{tpu_custom_call.1} parent=15 // pred_check
          %p472 = pneg %p213
        $region42: #{tpu_custom_call.1} parent=15 // pred_check_branch
          %474 = sbr.rel (%p472) target = $region44
        $region43: #{tpu_custom_call.1} parent=15 // pred_region
          %p475 = scmp.lt.s32.totalorder %s33, 1
          %s476 = scalar_select %p475, %s33, 1
          %s477 = scalar_lea.vmem %s6, %s476
        $region44: #{tpu_custom_call.1} parent=15 // pred_fallthru
          _
        // Predicated region
        $region45: #{tpu_custom_call.1} parent=15 // pred_check
          %p478 = pneg %p239
        $region46: #{tpu_custom_call.1} parent=15 // pred_check_branch
          %480 = sbr.rel (%p478) target = $region48
        $region47: #{tpu_custom_call.1} parent=15 // pred_region
          %p481 = scmp.lt.s32.totalorder %s33, 1
          %s482 = scalar_select %p481, %s33, 1
          %s483 = scalar_lea.vmem %s7, %s482
        $region48: #{tpu_custom_call.1} parent=15 // pred_fallthru
          _
        // Predicated region
        $region49: #{tpu_custom_call.1} parent=15 // pred_check
          %p484 = pneg %p265
        $region50: #{tpu_custom_call.1} parent=15 // pred_check_branch
          %486 = sbr.rel (%p484) target = $region52
        $region51: #{tpu_custom_call.1} parent=15 // pred_region
          %p487 = scmp.lt.s32.totalorder %s33, 1
          %s488 = scalar_select %p487, %s33, 1
          %s489 = scalar_lea.vmem %s8, %s488
        $region52: #{tpu_custom_call.1} parent=15 // pred_fallthru
          _
        // Predicated region
        $region53: #{tpu_custom_call.1} parent=15 // pred_check
          %p490 = pneg %p291
        $region54: #{tpu_custom_call.1} parent=15 // pred_check_branch
          %492 = sbr.rel (%p490) target = $region56
        $region55: #{tpu_custom_call.1} parent=15 // pred_region
          %p493 = scmp.lt.s32.totalorder %s33, 1
          %s494 = scalar_select %p493, %s33, 1
          %s495 = smul.addr %s494, 4
          %s496 = smul.addr %s495, 4
          %s497 = scalar_lea.vmem %s9, %s496
        $region56: #{tpu_custom_call.1} parent=15 // pred_fallthru
          _
        // Predicated region
        $region57: #{tpu_custom_call.1} parent=15 // pred_check
          %p498 = pneg %p317
        $region58: #{tpu_custom_call.1} parent=15 // pred_check_branch
          %500 = sbr.rel (%p498) target = $region60
        $region59: #{tpu_custom_call.1} parent=15 // pred_region
          %p501 = scmp.lt.s32.totalorder %s33, 1
          %s502 = scalar_select %p501, %s33, 1
          %s503 = scalar_lea.vmem %s10, %s502
        $region60: #{tpu_custom_call.1} parent=15 // pred_fallthru
          _
        // Predicated region
        $region61: #{tpu_custom_call.1} parent=15 // pred_check
          %p504 = pneg %p343
        $region62: #{tpu_custom_call.1} parent=15 // pred_check_branch
          %506 = sbr.rel (%p504) target = $region64
        $region63: #{tpu_custom_call.1} parent=15 // pred_region
          %p507 = scmp.lt.s32.totalorder %s33, 1
          %s508 = scalar_select %p507, %s33, 1
          %s509 = smul.addr %s508, 16
          %s510 = smul.addr %s509, 4
          %s511 = scalar_lea.vmem %s11, %s510
        $region64: #{tpu_custom_call.1} parent=15 // pred_fallthru
          _
        // Predicated region
        $region65: #{tpu_custom_call.1} parent=15 // pred_check
          %p512 = pneg %p369
        $region66: #{tpu_custom_call.1} parent=15 // pred_check_branch
          %514 = sbr.rel (%p512) target = $region68
        $region67: #{tpu_custom_call.1} parent=15 // pred_region
          %p515 = scmp.lt.s32.totalorder %s33, 1
          %s516 = scalar_select %p515, %s33, 1
          %s517 = scalar_lea.vmem %s12, %s516
        $region68: #{tpu_custom_call.1} parent=15 // pred_fallthru
          _
      $region16: #{tpu_custom_call.1} parent=5 // pred_fallthru
        _
      %p518 = scmp.le.s32.totalorder 1, %s25
      %p519 = scmp.lt.s32.totalorder %s25, 5
      %p520 = pnand %p518, %p519
      %p521 = pneg %p520
      // Predicated region
      $region69: #{tpu_custom_call.1} parent=5 // pred_check
        _
      $region70: #{tpu_custom_call.1} parent=5 // pred_check_branch
        %523 = sbr.rel (%p520) target = $region72
      $region71: #{tpu_custom_call.1} parent=5 // pred_region
        %s524 = ssub.s32 %s25, 1
        %s525 = sand.u32 %s50, 1
        %s526 = scalar_lea.sflag [#allocation3], %s525
        %s527 = sand.u32 %s50, 1
        %s528 = smul.addr %s527, 8
        %s529 = scalar_lea.vmem [#allocation2], %s528
        // Predicated region
        $region73: #{tpu_custom_call.1} parent=71 // pred_check
          %p530 = pneg %p63
        $region74: #{tpu_custom_call.1} parent=71 // pred_check_branch
          %532 = sbr.rel (%p530) target = $region76
        $region75: #{tpu_custom_call.1} parent=71 // pred_region
          %533 = dma.done %s526, 128
        $region76: #{tpu_custom_call.1} parent=71 // pred_fallthru
          _
        %s534 = sand.u32 %s50, 1
        %s535 = scalar_lea.sflag [#allocation3], %s534
        %s536 = sand.u32 %s50, 1
        %s537 = smul.addr %s536, 8
        %s538 = scalar_lea.vmem [#allocation2], %s537
        %p539 = pneg %p63
        %p540 = pneg %p60
        %p541 = scmp.lt.s32.totalorder %s35, 1
        %s542 = scalar_select %p541, %s35, 1
        %s543 = scalar_lea.vmem %s1, %s542
        %p544 = pneg %p89
        %p545 = pneg %p86
        %p546 = scmp.lt.s32.totalorder %s35, 1
        %s547 = scalar_select %p546, %s35, 1
        %s548 = scalar_lea.vmem %s2, %s547
        %p549 = pneg %p115
        %p550 = pneg %p112
        %p551 = scmp.lt.s32.totalorder %s35, 1
        %s552 = scalar_select %p551, %s35, 1
        %s553 = smul.addr %s552, 4
        %s554 = smul.addr %s553, 4
        %s555 = scalar_lea.vmem %s3, %s554
        %p556 = pneg %p141
        %p557 = pneg %p138
        %p558 = scmp.lt.s32.totalorder %s35, 1
        %s559 = scalar_select %p558, %s35, 1
        %s560 = scalar_lea.vmem %s4, %s559
        %p561 = pneg %p167
        %p562 = pneg %p164
        %p563 = scmp.lt.s32.totalorder %s35, 1
        %s564 = scalar_select %p563, %s35, 1
        %s565 = smul.addr %s564, 4
        %s566 = smul.addr %s565, 4
        %s567 = scalar_lea.vmem %s5, %s566
        %p568 = pneg %p193
        %p569 = pneg %p190
        %p570 = scmp.lt.s32.totalorder %s35, 1
        %s571 = scalar_select %p570, %s35, 1
        %s572 = scalar_lea.vmem %s6, %s571
        %p573 = pneg %p219
        %p574 = pneg %p216
        %p575 = scmp.lt.s32.totalorder %s35, 1
        %s576 = scalar_select %p575, %s35, 1
        %s577 = scalar_lea.vmem %s7, %s576
        %p578 = pneg %p245
        %p579 = pneg %p242
        %p580 = scmp.lt.s32.totalorder %s35, 1
        %s581 = scalar_select %p580, %s35, 1
        %s582 = scalar_lea.vmem %s8, %s581
        %p583 = pneg %p271
        %p584 = pneg %p268
        %p585 = scmp.lt.s32.totalorder %s35, 1
        %s586 = scalar_select %p585, %s35, 1
        %s587 = smul.addr %s586, 4
        %s588 = smul.addr %s587, 4
        %s589 = scalar_lea.vmem %s9, %s588
        %p590 = pneg %p297
        %p591 = pneg %p294
        %p592 = scmp.lt.s32.totalorder %s35, 1
        %s593 = scalar_select %p592, %s35, 1
        %s594 = scalar_lea.vmem %s10, %s593
        %p595 = pneg %p323
        %p596 = pneg %p320
        %p597 = scmp.lt.s32.totalorder %s35, 1
        %s598 = scalar_select %p597, %s35, 1
        %s599 = smul.addr %s598, 16
        %s600 = smul.addr %s599, 4
        %s601 = scalar_lea.vmem %s11, %s600
        %p602 = pneg %p349
        %p603 = pneg %p346
        %p604 = scmp.lt.s32.totalorder %s35, 1
        %s605 = scalar_select %p604, %s35, 1
        %s606 = scalar_lea.vmem %s12, %s605
        %p607 = pneg %p375
        %p608 = pneg %p372
        %p609 = pneg %p401
        %p610 = pneg %p398
        %s611 = sand.u32 %s388, 1
        %s612 = scalar_lea.sflag [#allocation4], %s611
        %s613 = sand.u32 %s388, 1
        %s614 = smul.addr %s613, 8
        %s615 = scalar_lea.vmem [#allocation5], %s614
        %p616 = scmp.lt.s32.totalorder %s35, 1
        %s617 = scalar_select %p616, %s35, 1
        %s618 = scalar_lea.vmem %s1, %s617
        %p619 = scmp.lt.s32.totalorder %s35, 1
        %s620 = scalar_select %p619, %s35, 1
        %s621 = scalar_lea.vmem %s2, %s620
        %p622 = scmp.lt.s32.totalorder %s35, 1
        %s623 = scalar_select %p622, %s35, 1
        %s624 = smul.addr %s623, 4
        %s625 = smul.addr %s624, 4
        %s626 = scalar_lea.vmem %s3, %s625
        %p627 = scmp.lt.s32.totalorder %s35, 1
        %s628 = scalar_select %p627, %s35, 1
        %s629 = scalar_lea.vmem %s4, %s628
        %p630 = scmp.lt.s32.totalorder %s35, 1
        %s631 = scalar_select %p630, %s35, 1
        %s632 = smul.addr %s631, 4
        %s633 = smul.addr %s632, 4
        %s634 = scalar_lea.vmem %s5, %s633
        %p635 = scmp.lt.s32.totalorder %s35, 1
        %s636 = scalar_select %p635, %s35, 1
        %s637 = scalar_lea.vmem %s6, %s636
        %p638 = scmp.lt.s32.totalorder %s35, 1
        %s639 = scalar_select %p638, %s35, 1
        %s640 = scalar_lea.vmem %s7, %s639
        %p641 = scmp.lt.s32.totalorder %s35, 1
        %s642 = scalar_select %p641, %s35, 1
        %s643 = scalar_lea.vmem %s8, %s642
        %p644 = scmp.lt.s32.totalorder %s35, 1
        %s645 = scalar_select %p644, %s35, 1
        %s646 = smul.addr %s645, 4
        %s647 = smul.addr %s646, 4
        %s648 = scalar_lea.vmem %s9, %s647
        %p649 = scmp.lt.s32.totalorder %s35, 1
        %s650 = scalar_select %p649, %s35, 1
        %s651 = scalar_lea.vmem %s10, %s650
        %p652 = scmp.lt.s32.totalorder %s35, 1
        %s653 = scalar_select %p652, %s35, 1
        %s654 = smul.addr %s653, 16
        %s655 = smul.addr %s654, 4
        %s656 = scalar_lea.vmem %s11, %s655
        %p657 = scmp.lt.s32.totalorder %s35, 1
        %s658 = scalar_select %p657, %s35, 1
        %s659 = scalar_lea.vmem %s12, %s658
        %p661 = scmp.eq.s32.totalorder %s35, 0
        // Predicated region
        $region77: #{tpu_custom_call.1} parent=71 // pred_check
          %p662 = pneg %p661
        $region78: #{tpu_custom_call.1} parent=71 // pred_check_branch
          %664 = sbr.rel (%p662) target = $region80
        $region79: #{tpu_custom_call.1} parent=71 // pred_region
          %v665 = vld [vmem:[%s529] sm:$0xff]
          %vm666 = vcmask 261120
          %667 = vst.msk [vmem:[%s615] sm:$0xff] %vm666, %v665
        $region80: #{tpu_custom_call.1} parent=71 // pred_fallthru
          _
        %v668 = vld [vmem:[%s615] sm:$0xff]
        %v669 = vld [vmem:[%s618] sm:$0x1]
        %v670 = vld [vmem:[%s621] sm:$0x1]
        %vm671 = vcmask 261120
        %v672 = vsel %vm671, %v668, 0.0
        %673 = vadd.xlane.f32.xlu0 %v672
        %v674 = vpop.xlane.xlu0 %673
        %v675 = vrcp.pop 32.0
        %v676 = vmul.f32 %v674, %v675
        %v677 = vsub.f32 %v668, %v676
        %v678 = vmul.f32 %v677, %v677
        %v679 = vsel %vm671, %v678, 0.0
        %680 = vadd.xlane.f32.xlu0 %v679
        %v681 = vpop.xlane.xlu0 %680
        %v682 = vmul.f32 %v681, %v675
        %v683 = vadd.f32 %v682, 1e-05
        %v684 = vrsqrt.pop %v683
        %v685 = vmul.f32 %v677, %v684
        %v687 = vlaneseq
        %v688 = vshrl.u32 %v687, 7
        %v689 = vsub.s32 0, %v688
        %v690 = vrot.slane %v669, %v689
        %v692 = vmul.f32 %v685, %v690
        %v694 = vlaneseq
        %v695 = vshrl.u32 %v694, 7
        %v696 = vsub.s32 0, %v695
        %v697 = vrot.slane %v670, %v696
        %v699 = vadd.f32 %v692, %v697
        %v700 = vpack.c.bf16 %v699, %v699
        %v701 = vld [vmem:[%s626] sm:$0xf]
        %v702 = vld [vmem:[%s626 + $0x4] sm:$0xf]
        %v703 = vld [vmem:[%s626 + $0x8] sm:$0xf]
        %v704 = vld [vmem:[%s626 + $0xc] sm:$0xf]
        %v705 = vld [vmem:[%s629] sm:$0x1]
        %v707 = vlaneseq
        %v708 = vshrl.u32 %v707, 7
        %v709 = vsub.s32 0, %v708
        %v710 = vrot.slane %v705, %v709
        %v716 = vunpack.c.l.b16 %v701
        %v717 = vunpack.c.l.b16 %v702
        %v718 = vunpack.c.l.b16 %v703
        %v719 = vunpack.c.l.b16 %v704
        %v720 = vpack.c.b16 %v717, %v716
        %v721 = vpack.c.b16 %v719, %v718
        %v725 = vsel %vm671, %v700, 0
        %727 = vmatprep.subr.bf16.mxu0 0
        %728 = vmatpush1.bf16.msra.mxu0 0
        %729 = vmatprep.subr.bf16.mxu0 0
        %730 = vmatpush1.bf16.msra.mxu0 0
        %731 = vmatprep.subr.bf16.mxu0 0
        %732 = vmatpush1.bf16.msra.mxu0 0
        %733 = vmatprep.subr.bf16.mxu0 0
        %734 = vmatpush1.bf16.msra.mxu0 0
        %735 = vmatprep.subr.bf16.mxu0 0
        %736 = vmatpush1.bf16.msra.mxu0 0
        %737 = vmatprep.subr.bf16.mxu0 0
        %738 = vmatpush1.bf16.msra.mxu0 0
        %739 = vmatprep.subr.bf16.mxu0 0
        %740 = vmatpush1.bf16.msra.mxu0 %v721
        %741 = vmatprep.subr.bf16.mxu0 0
        %742 = vmatpush1.bf16.msra.mxu0 %v720
        %743 = vmatprep.subr.bf16.mxu0 0
        %744 = vmatpush2.bf16.msra.mxu0 0
        %745 = vmatprep.subr.bf16.mxu0 0
        %746 = vmatpush2.bf16.msra.mxu0 0
        %747 = vmatprep.subr.bf16.mxu0 0
        %748 = vmatpush2.bf16.msra.mxu0 0
        %749 = vmatprep.subr.bf16.mxu0 0
        %750 = vmatpush2.bf16.msra.mxu0 0
        %751 = vmatprep.subr.bf16.mxu0 0
        %752 = vmatpush2.bf16.msra.mxu0 0
        %753 = vmatprep.subr.bf16.mxu0 0
        %754 = vmatpush2.bf16.msra.mxu0 0
        %755 = vmatprep.subr.bf16.mxu0 0
        %756 = vmatpush2.bf16.msra.mxu0 0
        %757 = vmatprep.subr.bf16.mxu0 0
        %758 = vmatpush2.bf16.msra.mxu0 0
        %759 = vmatprep.mubr.bf16.mxu0 0
        %760 = vmatmul.mubr.bf16.gmra.mxu0 %v725
        %v761 = vpop.f32.mrf.mxu0
        %v762 = vadd.f32 %v710, %v761
        %v763 = vpop.f32.mrf.mxu0
        %v764 = vpop.f32.mrf.mxu0
        %v765 = vpop.f32.mrf.mxu0
        %766 = vdwg.mxu0
        %v767 = vpack.c.bf16 %v762, %v762
        %769 = vrot.lane.b32.xlu0 %v767, 96
        %v770 = vpop.permute.xlu0 %769
        %vm771 = vcmask 64512
        %v773 = vsel %vm771, %v767, 0
        %v776 = vsel %vm771, %v770, 0
        %778 = vmatprep.subr.bf16.mxu0 0
        %779 = vmatpush1.bf16.xpose.msra.mxu0 0
        %780 = vmatprep.subr.bf16.mxu0 0
        %781 = vmatpush1.bf16.xpose.msra.mxu0 0
        %782 = vmatprep.subr.bf16.mxu0 0
        %783 = vmatpush1.bf16.xpose.msra.mxu0 0
        %784 = vmatprep.subr.bf16.mxu0 0
        %785 = vmatpush1.bf16.xpose.msra.mxu0 0
        %786 = vmatprep.subr.bf16.mxu0 0
        %787 = vmatpush1.bf16.xpose.msra.mxu0 0
        %788 = vmatprep.subr.bf16.mxu0 0
        %789 = vmatpush1.bf16.xpose.msra.mxu0 0
        %790 = vmatprep.subr.bf16.mxu0 0
        %791 = vmatpush1.bf16.xpose.msra.mxu0 0
        %792 = vmatprep.subr.bf16.mxu0 0
        %793 = vmatpush1.bf16.xpose.msra.mxu0 %v776
        %794 = vmatprep.subr.bf16.mxu0 0
        %795 = vmatpush2.bf16.xpose.msra.mxu0 0
        %796 = vmatprep.subr.bf16.mxu0 0
        %797 = vmatpush2.bf16.xpose.msra.mxu0 0
        %798 = vmatprep.subr.bf16.mxu0 0
        %799 = vmatpush2.bf16.xpose.msra.mxu0 0
        %800 = vmatprep.subr.bf16.mxu0 0
        %801 = vmatpush2.bf16.xpose.msra.mxu0 0
        %802 = vmatprep.subr.bf16.mxu0 0
        %803 = vmatpush2.bf16.xpose.msra.mxu0 0
        %804 = vmatprep.subr.bf16.mxu0 0
        %805 = vmatpush2.bf16.xpose.msra.mxu0 0
        %806 = vmatprep.subr.bf16.mxu0 0
        %807 = vmatpush2.bf16.xpose.msra.mxu0 0
        %808 = vmatprep.subr.bf16.mxu0 0
        %809 = vmatpush2.bf16.xpose.msra.mxu0 0
        %810 = vmatprep.mubr.bf16.mxu0 0
        %811 = vmatmul.mubr.bf16.gmra.mxu0 %v773
        %v812 = vpop.f32.mrf.mxu0
        %v813 = vadd.f32 0.0, %v812
        %v814 = vpop.f32.mrf.mxu0
        %v815 = vpop.f32.mrf.mxu0
        %v816 = vpop.f32.mrf.mxu0
        %817 = vdwg.mxu0
        %v818 = vsel %vm771, %v813, -inf
        %819 = vmax.xlane.f32.xlu0 %v818
        %v820 = vpop.xlane.xlu0 %819
        %v821 = vsub.f32 %v813, %v820
        %v822 = vmul.f32 %v821, 1.442695
        %v823 = vpow.pop %v822
        %v824 = vsel %vm771, %v823, 0.0
        %825 = vadd.xlane.f32.xlu0 %v824
        %v826 = vpop.xlane.xlu0 %825
        %v827 = vrcp.pop %v826
        %v828 = vmul.f32 %v823, %v827
        %v829 = vpack.c.bf16 %v828, %v828
        %830 = vrot.lane.b32.xlu0 %v767, 64
        %v831 = vpop.permute.xlu0 %830
        %v833 = vsel %vm771, %v829, 0
        %vm835 = vcmask 1043456
        %v837 = vsel %vm835, %v831, 0
        %839 = vmatprep.subr.bf16.mxu0 0
        %840 = vmatpush1.bf16.msra.mxu0 0
        %841 = vmatprep.subr.bf16.mxu0 0
        %842 = vmatpush1.bf16.msra.mxu0 0
        %843 = vmatprep.subr.bf16.mxu0 0
        %844 = vmatpush1.bf16.msra.mxu0 0
        %845 = vmatprep.subr.bf16.mxu0 0
        %846 = vmatpush1.bf16.msra.mxu0 0
        %847 = vmatprep.subr.bf16.mxu0 0
        %848 = vmatpush1.bf16.msra.mxu0 0
        %849 = vmatprep.subr.bf16.mxu0 0
        %850 = vmatpush1.bf16.msra.mxu0 0
        %851 = vmatprep.subr.bf16.mxu0 0
        %852 = vmatpush1.bf16.msra.mxu0 0
        %853 = vmatprep.subr.bf16.mxu0 0
        %854 = vmatpush1.bf16.msra.mxu0 %v837
        %855 = vmatprep.subr.bf16.mxu0 0
        %856 = vmatpush2.bf16.msra.mxu0 0
        %857 = vmatprep.subr.bf16.mxu0 0
        %858 = vmatpush2.bf16.msra.mxu0 0
        %859 = vmatprep.subr.bf16.mxu0 0
        %860 = vmatpush2.bf16.msra.mxu0 0
        %861 = vmatprep.subr.bf16.mxu0 0
        %862 = vmatpush2.bf16.msra.mxu0 0
        %863 = vmatprep.subr.bf16.mxu0 0
        %864 = vmatpush2.bf16.msra.mxu0 0
        %865 = vmatprep.subr.bf16.mxu0 0
        %866 = vmatpush2.bf16.msra.mxu0 0
        %867 = vmatprep.subr.bf16.mxu0 0
        %868 = vmatpush2.bf16.msra.mxu0 0
        %869 = vmatprep.subr.bf16.mxu0 0
        %870 = vmatpush2.bf16.msra.mxu0 0
        %871 = vmatprep.mubr.bf16.mxu0 0
        %872 = vmatmul.mubr.bf16.gmra.mxu0 %v833
        %v873 = vpop.f32.mrf.mxu0
        %v874 = vadd.f32 0.0, %v873
        %v875 = vpop.f32.mrf.mxu0
        %v876 = vpop.f32.mrf.mxu0
        %v877 = vpop.f32.mrf.mxu0
        %878 = vdwg.mxu0
        %879 = vrot.lane.b32.xlu0 %v767, 120
        %v880 = vpop.permute.xlu0 %879
        %881 = vrot.lane.b32.xlu0 %v767, 88
        %v882 = vpop.permute.xlu0 %881
        %v884 = vsel %vm771, %v880, 0
        %v887 = vsel %vm771, %v882, 0
        %889 = vmatprep.subr.bf16.mxu0 0
        %890 = vmatpush1.bf16.xpose.msra.mxu0 0
        %891 = vmatprep.subr.bf16.mxu0 0
        %892 = vmatpush1.bf16.xpose.msra.mxu0 0
        %893 = vmatprep.subr.bf16.mxu0 0
        %894 = vmatpush1.bf16.xpose.msra.mxu0 0
        %895 = vmatprep.subr.bf16.mxu0 0
        %896 = vmatpush1.bf16.xpose.msra.mxu0 0
        %897 = vmatprep.subr.bf16.mxu0 0
        %898 = vmatpush1.bf16.xpose.msra.mxu0 0
        %899 = vmatprep.subr.bf16.mxu0 0
        %900 = vmatpush1.bf16.xpose.msra.mxu0 0
        %901 = vmatprep.subr.bf16.mxu0 0
        %902 = vmatpush1.bf16.xpose.msra.mxu0 0
        %903 = vmatprep.subr.bf16.mxu0 0
        %904 = vmatpush1.bf16.xpose.msra.mxu0 %v887
        %905 = vmatprep.subr.bf16.mxu0 0
        %906 = vmatpush2.bf16.xpose.msra.mxu0 0
        %907 = vmatprep.subr.bf16.mxu0 0
        %908 = vmatpush2.bf16.xpose.msra.mxu0 0
        %909 = vmatprep.subr.bf16.mxu0 0
        %910 = vmatpush2.bf16.xpose.msra.mxu0 0
        %911 = vmatprep.subr.bf16.mxu0 0
        %912 = vmatpush2.bf16.xpose.msra.mxu0 0
        %913 = vmatprep.subr.bf16.mxu0 0
        %914 = vmatpush2.bf16.xpose.msra.mxu0 0
        %915 = vmatprep.subr.bf16.mxu0 0
        %916 = vmatpush2.bf16.xpose.msra.mxu0 0
        %917 = vmatprep.subr.bf16.mxu0 0
        %918 = vmatpush2.bf16.xpose.msra.mxu0 0
        %919 = vmatprep.subr.bf16.mxu0 0
        %920 = vmatpush2.bf16.xpose.msra.mxu0 0
        %921 = vmatprep.mubr.bf16.mxu0 0
        %922 = vmatmul.mubr.bf16.gmra.mxu0 %v884
        %v923 = vpop.f32.mrf.mxu0
        %v924 = vadd.f32 0.0, %v923
        %v925 = vpop.f32.mrf.mxu0
        %v926 = vpop.f32.mrf.mxu0
        %v927 = vpop.f32.mrf.mxu0
        %928 = vdwg.mxu0
        %v929 = vsel %vm771, %v924, -inf
        %930 = vmax.xlane.f32.xlu0 %v929
        %v931 = vpop.xlane.xlu0 %930
        %v932 = vsub.f32 %v924, %v931
        %v933 = vmul.f32 %v932, 1.442695
        %v934 = vpow.pop %v933
        %v935 = vsel %vm771, %v934, 0.0
        %936 = vadd.xlane.f32.xlu0 %v935
        %v937 = vpop.xlane.xlu0 %936
        %v938 = vrcp.pop %v937
        %v939 = vmul.f32 %v934, %v938
        %v940 = vpack.c.bf16 %v939, %v939
        %941 = vrot.lane.b32.xlu0 %v767, 56
        %v942 = vpop.permute.xlu0 %941
        %v944 = vsel %vm771, %v940, 0
        %v947 = vsel %vm835, %v942, 0
        %949 = vmatprep.subr.bf16.mxu0 0
        %950 = vmatpush1.bf16.msra.mxu0 0
        %951 = vmatprep.subr.bf16.mxu0 0
        %952 = vmatpush1.bf16.msra.mxu0 0
        %953 = vmatprep.subr.bf16.mxu0 0
        %954 = vmatpush1.bf16.msra.mxu0 0
        %955 = vmatprep.subr.bf16.mxu0 0
        %956 = vmatpush1.bf16.msra.mxu0 0
        %957 = vmatprep.subr.bf16.mxu0 0
        %958 = vmatpush1.bf16.msra.mxu0 0
        %959 = vmatprep.subr.bf16.mxu0 0
        %960 = vmatpush1.bf16.msra.mxu0 0
        %961 = vmatprep.subr.bf16.mxu0 0
        %962 = vmatpush1.bf16.msra.mxu0 0
        %963 = vmatprep.subr.bf16.mxu0 0
        %964 = vmatpush1.bf16.msra.mxu0 %v947
        %965 = vmatprep.subr.bf16.mxu0 0
        %966 = vmatpush2.bf16.msra.mxu0 0
        %967 = vmatprep.subr.bf16.mxu0 0
        %968 = vmatpush2.bf16.msra.mxu0 0
        %969 = vmatprep.subr.bf16.mxu0 0
        %970 = vmatpush2.bf16.msra.mxu0 0
        %971 = vmatprep.subr.bf16.mxu0 0
        %972 = vmatpush2.bf16.msra.mxu0 0
        %973 = vmatprep.subr.bf16.mxu0 0
        %974 = vmatpush2.bf16.msra.mxu0 0
        %975 = vmatprep.subr.bf16.mxu0 0
        %976 = vmatpush2.bf16.msra.mxu0 0
        %977 = vmatprep.subr.bf16.mxu0 0
        %978 = vmatpush2.bf16.msra.mxu0 0
        %979 = vmatprep.subr.bf16.mxu0 0
        %980 = vmatpush2.bf16.msra.mxu0 0
        %981 = vmatprep.mubr.bf16.mxu0 0
        %982 = vmatmul.mubr.bf16.gmra.mxu0 %v944
        %v983 = vpop.f32.mrf.mxu0
        %v984 = vadd.f32 0.0, %v983
        %v985 = vpop.f32.mrf.mxu0
        %v986 = vpop.f32.mrf.mxu0
        %v987 = vpop.f32.mrf.mxu0
        %988 = vdwg.mxu0
        %989 = vrot.lane.b32.xlu0 %v767, 112
        %v990 = vpop.permute.xlu0 %989
        %991 = vrot.lane.b32.xlu0 %v767, 80
        %v992 = vpop.permute.xlu0 %991
        %v994 = vsel %vm771, %v990, 0
        %v997 = vsel %vm771, %v992, 0
        %999 = vmatprep.subr.bf16.mxu0 0
        %1000 = vmatpush1.bf16.xpose.msra.mxu0 0
        %1001 = vmatprep.subr.bf16.mxu0 0
        %1002 = vmatpush1.bf16.xpose.msra.mxu0 0
        %1003 = vmatprep.subr.bf16.mxu0 0
        %1004 = vmatpush1.bf16.xpose.msra.mxu0 0
        %1005 = vmatprep.subr.bf16.mxu0 0
        %1006 = vmatpush1.bf16.xpose.msra.mxu0 0
        %1007 = vmatprep.subr.bf16.mxu0 0
        %1008 = vmatpush1.bf16.xpose.msra.mxu0 0
        %1009 = vmatprep.subr.bf16.mxu0 0
        %1010 = vmatpush1.bf16.xpose.msra.mxu0 0
        %1011 = vmatprep.subr.bf16.mxu0 0
        %1012 = vmatpush1.bf16.xpose.msra.mxu0 0
        %1013 = vmatprep.subr.bf16.mxu0 0
        %1014 = vmatpush1.bf16.xpose.msra.mxu0 %v997
        %1015 = vmatprep.subr.bf16.mxu0 0
        %1016 = vmatpush2.bf16.xpose.msra.mxu0 0
        %1017 = vmatprep.subr.bf16.mxu0 0
        %1018 = vmatpush2.bf16.xpose.msra.mxu0 0
        %1019 = vmatprep.subr.bf16.mxu0 0
        %1020 = vmatpush2.bf16.xpose.msra.mxu0 0
        %1021 = vmatprep.subr.bf16.mxu0 0
        %1022 = vmatpush2.bf16.xpose.msra.mxu0 0
        %1023 = vmatprep.subr.bf16.mxu0 0
        %1024 = vmatpush2.bf16.xpose.msra.mxu0 0
        %1025 = vmatprep.subr.bf16.mxu0 0
        %1026 = vmatpush2.bf16.xpose.msra.mxu0 0
        %1027 = vmatprep.subr.bf16.mxu0 0
        %1028 = vmatpush2.bf16.xpose.msra.mxu0 0
        %1029 = vmatprep.subr.bf16.mxu0 0
        %1030 = vmatpush2.bf16.xpose.msra.mxu0 0
        %1031 = vmatprep.mubr.bf16.mxu0 0
        %1032 = vmatmul.mubr.bf16.gmra.mxu0 %v994
        %v1033 = vpop.f32.mrf.mxu0
        %v1034 = vadd.f32 0.0, %v1033
        %v1035 = vpop.f32.mrf.mxu0
        %v1036 = vpop.f32.mrf.mxu0
        %v1037 = vpop.f32.mrf.mxu0
        %1038 = vdwg.mxu0
        %v1039 = vsel %vm771, %v1034, -inf
        %1040 = vmax.xlane.f32.xlu0 %v1039
        %v1041 = vpop.xlane.xlu0 %1040
        %v1042 = vsub.f32 %v1034, %v1041
        %v1043 = vmul.f32 %v1042, 1.442695
        %v1044 = vpow.pop %v1043
        %v1045 = vsel %vm771, %v1044, 0.0
        %1046 = vadd.xlane.f32.xlu0 %v1045
        %v1047 = vpop.xlane.xlu0 %1046
        %v1048 = vrcp.pop %v1047
        %v1049 = vmul.f32 %v1044, %v1048
        %v1050 = vpack.c.bf16 %v1049, %v1049
        %1051 = vrot.lane.b32.xlu0 %v767, 48
        %v1052 = vpop.permute.xlu0 %1051
        %v1054 = vsel %vm771, %v1050, 0
        %v1057 = vsel %vm835, %v1052, 0
        %1059 = vmatprep.subr.bf16.mxu0 0
        %1060 = vmatpush1.bf16.msra.mxu0 0
        %1061 = vmatprep.subr.bf16.mxu0 0
        %1062 = vmatpush1.bf16.msra.mxu0 0
        %1063 = vmatprep.subr.bf16.mxu0 0
        %1064 = vmatpush1.bf16.msra.mxu0 0
        %1065 = vmatprep.subr.bf16.mxu0 0
        %1066 = vmatpush1.bf16.msra.mxu0 0
        %1067 = vmatprep.subr.bf16.mxu0 0
        %1068 = vmatpush1.bf16.msra.mxu0 0
        %1069 = vmatprep.subr.bf16.mxu0 0
        %1070 = vmatpush1.bf16.msra.mxu0 0
        %1071 = vmatprep.subr.bf16.mxu0 0
        %1072 = vmatpush1.bf16.msra.mxu0 0
        %1073 = vmatprep.subr.bf16.mxu0 0
        %1074 = vmatpush1.bf16.msra.mxu0 %v1057
        %1075 = vmatprep.subr.bf16.mxu0 0
        %1076 = vmatpush2.bf16.msra.mxu0 0
        %1077 = vmatprep.subr.bf16.mxu0 0
        %1078 = vmatpush2.bf16.msra.mxu0 0
        %1079 = vmatprep.subr.bf16.mxu0 0
        %1080 = vmatpush2.bf16.msra.mxu0 0
        %1081 = vmatprep.subr.bf16.mxu0 0
        %1082 = vmatpush2.bf16.msra.mxu0 0
        %1083 = vmatprep.subr.bf16.mxu0 0
        %1084 = vmatpush2.bf16.msra.mxu0 0
        %1085 = vmatprep.subr.bf16.mxu0 0
        %1086 = vmatpush2.bf16.msra.mxu0 0
        %1087 = vmatprep.subr.bf16.mxu0 0
        %1088 = vmatpush2.bf16.msra.mxu0 0
        %1089 = vmatprep.subr.bf16.mxu0 0
        %1090 = vmatpush2.bf16.msra.mxu0 0
        %1091 = vmatprep.mubr.bf16.mxu0 0
        %1092 = vmatmul.mubr.bf16.gmra.mxu0 %v1054
        %v1093 = vpop.f32.mrf.mxu0
        %v1094 = vadd.f32 0.0, %v1093
        %v1095 = vpop.f32.mrf.mxu0
        %v1096 = vpop.f32.mrf.mxu0
        %v1097 = vpop.f32.mrf.mxu0
        %1098 = vdwg.mxu0
        %1099 = vrot.lane.b32.xlu0 %v767, 104
        %v1100 = vpop.permute.xlu0 %1099
        %1101 = vrot.lane.b32.xlu0 %v767, 72
        %v1102 = vpop.permute.xlu0 %1101
        %v1104 = vsel %vm771, %v1100, 0
        %v1107 = vsel %vm771, %v1102, 0
        %1109 = vmatprep.subr.bf16.mxu0 0
        %1110 = vmatpush1.bf16.xpose.msra.mxu0 0
        %1111 = vmatprep.subr.bf16.mxu0 0
        %1112 = vmatpush1.bf16.xpose.msra.mxu0 0
        %1113 = vmatprep.subr.bf16.mxu0 0
        %1114 = vmatpush1.bf16.xpose.msra.mxu0 0
        %1115 = vmatprep.subr.bf16.mxu0 0
        %1116 = vmatpush1.bf16.xpose.msra.mxu0 0
        %1117 = vmatprep.subr.bf16.mxu0 0
        %1118 = vmatpush1.bf16.xpose.msra.mxu0 0
        %1119 = vmatprep.subr.bf16.mxu0 0
        %1120 = vmatpush1.bf16.xpose.msra.mxu0 0
        %1121 = vmatprep.subr.bf16.mxu0 0
        %1122 = vmatpush1.bf16.xpose.msra.mxu0 0
        %1123 = vmatprep.subr.bf16.mxu0 0
        %1124 = vmatpush1.bf16.xpose.msra.mxu0 %v1107
        %1125 = vmatprep.subr.bf16.mxu0 0
        %1126 = vmatpush2.bf16.xpose.msra.mxu0 0
        %1127 = vmatprep.subr.bf16.mxu0 0
        %1128 = vmatpush2.bf16.xpose.msra.mxu0 0
        %1129 = vmatprep.subr.bf16.mxu0 0
        %1130 = vmatpush2.bf16.xpose.msra.mxu0 0
        %1131 = vmatprep.subr.bf16.mxu0 0
        %1132 = vmatpush2.bf16.xpose.msra.mxu0 0
        %1133 = vmatprep.subr.bf16.mxu0 0
        %1134 = vmatpush2.bf16.xpose.msra.mxu0 0
        %1135 = vmatprep.subr.bf16.mxu0 0
        %1136 = vmatpush2.bf16.xpose.msra.mxu0 0
        %1137 = vmatprep.subr.bf16.mxu0 0
        %1138 = vmatpush2.bf16.xpose.msra.mxu0 0
        %1139 = vmatprep.subr.bf16.mxu0 0
        %1140 = vmatpush2.bf16.xpose.msra.mxu0 0
        %1141 = vmatprep.mubr.bf16.mxu0 0
        %1142 = vmatmul.mubr.bf16.gmra.mxu0 %v1104
        %v1143 = vpop.f32.mrf.mxu0
        %v1144 = vadd.f32 0.0, %v1143
        %v1145 = vpop.f32.mrf.mxu0
        %v1146 = vpop.f32.mrf.mxu0
        %v1147 = vpop.f32.mrf.mxu0
        %1148 = vdwg.mxu0
        %v1149 = vsel %vm771, %v1144, -inf
        %1150 = vmax.xlane.f32.xlu0 %v1149
        %v1151 = vpop.xlane.xlu0 %1150
        %v1152 = vsub.f32 %v1144, %v1151
        %v1153 = vmul.f32 %v1152, 1.442695
        %v1154 = vpow.pop %v1153
        %v1155 = vsel %vm771, %v1154, 0.0
        %1156 = vadd.xlane.f32.xlu0 %v1155
        %v1157 = vpop.xlane.xlu0 %1156
        %v1158 = vrcp.pop %v1157
        %v1159 = vmul.f32 %v1154, %v1158
        %v1160 = vpack.c.bf16 %v1159, %v1159
        %1161 = vrot.lane.b32.xlu0 %v767, 40
        %v1162 = vpop.permute.xlu0 %1161
        %v1164 = vsel %vm771, %v1160, 0
        %v1167 = vsel %vm835, %v1162, 0
        %1169 = vmatprep.subr.bf16.mxu0 0
        %1170 = vmatpush1.bf16.msra.mxu0 0
        %1171 = vmatprep.subr.bf16.mxu0 0
        %1172 = vmatpush1.bf16.msra.mxu0 0
        %1173 = vmatprep.subr.bf16.mxu0 0
        %1174 = vmatpush1.bf16.msra.mxu0 0
        %1175 = vmatprep.subr.bf16.mxu0 0
        %1176 = vmatpush1.bf16.msra.mxu0 0
        %1177 = vmatprep.subr.bf16.mxu0 0
        %1178 = vmatpush1.bf16.msra.mxu0 0
        %1179 = vmatprep.subr.bf16.mxu0 0
        %1180 = vmatpush1.bf16.msra.mxu0 0
        %1181 = vmatprep.subr.bf16.mxu0 0
        %1182 = vmatpush1.bf16.msra.mxu0 0
        %1183 = vmatprep.subr.bf16.mxu0 0
        %1184 = vmatpush1.bf16.msra.mxu0 %v1167
        %1185 = vmatprep.subr.bf16.mxu0 0
        %1186 = vmatpush2.bf16.msra.mxu0 0
        %1187 = vmatprep.subr.bf16.mxu0 0
        %1188 = vmatpush2.bf16.msra.mxu0 0
        %1189 = vmatprep.subr.bf16.mxu0 0
        %1190 = vmatpush2.bf16.msra.mxu0 0
        %1191 = vmatprep.subr.bf16.mxu0 0
        %1192 = vmatpush2.bf16.msra.mxu0 0
        %1193 = vmatprep.subr.bf16.mxu0 0
        %1194 = vmatpush2.bf16.msra.mxu0 0
        %1195 = vmatprep.subr.bf16.mxu0 0
        %1196 = vmatpush2.bf16.msra.mxu0 0
        %1197 = vmatprep.subr.bf16.mxu0 0
        %1198 = vmatpush2.bf16.msra.mxu0 0
        %1199 = vmatprep.subr.bf16.mxu0 0
        %1200 = vmatpush2.bf16.msra.mxu0 0
        %1201 = vmatprep.mubr.bf16.mxu0 0
        %1202 = vmatmul.mubr.bf16.gmra.mxu0 %v1164
        %v1203 = vpop.f32.mrf.mxu0
        %v1204 = vadd.f32 0.0, %v1203
        %v1205 = vpop.f32.mrf.mxu0
        %v1206 = vpop.f32.mrf.mxu0
        %v1207 = vpop.f32.mrf.mxu0
        %1208 = vdwg.mxu0
        %1210 = vrot.lane.b32.xlu0 %v984, 8
        %v1211 = vpop.permute.xlu0 %1210
        %1214 = vrot.lane.b32.xlu0 %v1094, 16
        %v1215 = vpop.permute.xlu0 %1214
        %1218 = vrot.lane.b32.xlu0 %v1204, 24
        %v1219 = vpop.permute.xlu0 %1218
        %v1221 = vsel %vm771, %v874, %v1211
        %vm1222 = vcmask 130048
        %v1223 = vsel %vm1222, %v1221, %v1215
        %vm1224 = vcmask 195584
        %v1225 = vsel %vm1224, %v1223, %v1219
        %v1226 = vpack.c.bf16 %v1225, %v1225
        %v1227 = vld [vmem:[%s634] sm:$0xf]
        %v1228 = vld [vmem:[%s634 + $0x4] sm:$0xf]
        %v1229 = vld [vmem:[%s634 + $0x8] sm:$0xf]
        %v1230 = vld [vmem:[%s634 + $0xc] sm:$0xf]
        %v1231 = vld [vmem:[%s637] sm:$0x1]
        %v1233 = vlaneseq
        %v1234 = vshrl.u32 %v1233, 7
        %v1235 = vsub.s32 0, %v1234
        %v1236 = vrot.slane %v1231, %v1235
        %v1242 = vunpack.c.l.b16 %v1227
        %v1243 = vunpack.c.l.b16 %v1228
        %v1244 = vunpack.c.l.b16 %v1229
        %v1245 = vunpack.c.l.b16 %v1230
        %v1246 = vpack.c.b16 %v1243, %v1242
        %v1247 = vpack.c.b16 %v1245, %v1244
        %v1251 = vsel %vm671, %v1226, 0
        %1253 = vmatprep.subr.bf16.mxu0 0
        %1254 = vmatpush1.bf16.msra.mxu0 0
        %1255 = vmatprep.subr.bf16.mxu0 0
        %1256 = vmatpush1.bf16.msra.mxu0 0
        %1257 = vmatprep.subr.bf16.mxu0 0
        %1258 = vmatpush1.bf16.msra.mxu0 0
        %1259 = vmatprep.subr.bf16.mxu0 0
        %1260 = vmatpush1.bf16.msra.mxu0 0
        %1261 = vmatprep.subr.bf16.mxu0 0
        %1262 = vmatpush1.bf16.msra.mxu0 0
        %1263 = vmatprep.subr.bf16.mxu0 0
        %1264 = vmatpush1.bf16.msra.mxu0 0
        %1265 = vmatprep.subr.bf16.mxu0 0
        %1266 = vmatpush1.bf16.msra.mxu0 %v1247
        %1267 = vmatprep.subr.bf16.mxu0 0
        %1268 = vmatpush1.bf16.msra.mxu0 %v1246
        %1269 = vmatprep.subr.bf16.mxu0 0
        %1270 = vmatpush2.bf16.msra.mxu0 0
        %1271 = vmatprep.subr.bf16.mxu0 0
        %1272 = vmatpush2.bf16.msra.mxu0 0
        %1273 = vmatprep.subr.bf16.mxu0 0
        %1274 = vmatpush2.bf16.msra.mxu0 0
        %1275 = vmatprep.subr.bf16.mxu0 0
        %1276 = vmatpush2.bf16.msra.mxu0 0
        %1277 = vmatprep.subr.bf16.mxu0 0
        %1278 = vmatpush2.bf16.msra.mxu0 0
        %1279 = vmatprep.subr.bf16.mxu0 0
        %1280 = vmatpush2.bf16.msra.mxu0 0
        %1281 = vmatprep.subr.bf16.mxu0 0
        %1282 = vmatpush2.bf16.msra.mxu0 0
        %1283 = vmatprep.subr.bf16.mxu0 0
        %1284 = vmatpush2.bf16.msra.mxu0 0
        %1285 = vmatprep.mubr.bf16.mxu0 0
        %1286 = vmatmul.mubr.bf16.gmra.mxu0 %v1251
        %v1287 = vpop.f32.mrf.mxu0
        %v1288 = vadd.f32 %v1236, %v1287
        %v1289 = vpop.f32.mrf.mxu0
        %v1290 = vpop.f32.mrf.mxu0
        %v1291 = vpop.f32.mrf.mxu0
        %1292 = vdwg.mxu0
        %v1293 = vadd.f32 %v668, %v1288
        %v1294 = vld [vmem:[%s640] sm:$0x1]
        %v1295 = vld [vmem:[%s643] sm:$0x1]
        %v1296 = vld [vmem:[%s648] sm:$0xf]
        %v1297 = vld [vmem:[%s648 + $0x4] sm:$0xf]
        %v1298 = vld [vmem:[%s648 + $0x8] sm:$0xf]
        %v1299 = vld [vmem:[%s648 + $0xc] sm:$0xf]
        %v1300 = vld [vmem:[%s651] sm:$0x1]
        %v1301 = vld [vmem:[%s656] sm:$0xf]
        %v1302 = vld [vmem:[%s656 + $0x4] sm:$0xf]
        %v1303 = vld [vmem:[%s656 + $0x8] sm:$0xf]
        %v1304 = vld [vmem:[%s656 + $0xc] sm:$0xf]
        %v1305 = vld [vmem:[%s656 + $0x10] sm:$0xf]
        %v1306 = vld [vmem:[%s656 + $0x14] sm:$0xf]
        %v1307 = vld [vmem:[%s656 + $0x18] sm:$0xf]
        %v1308 = vld [vmem:[%s656 + $0x1c] sm:$0xf]
        %v1309 = vld [vmem:[%s656 + $0x20] sm:$0xf]
        %v1310 = vld [vmem:[%s656 + $0x24] sm:$0xf]
        %v1311 = vld [vmem:[%s656 + $0x28] sm:$0xf]
        %v1312 = vld [vmem:[%s656 + $0x2c] sm:$0xf]
        %v1313 = vld [vmem:[%s656 + $0x30] sm:$0xf]
        %v1314 = vld [vmem:[%s656 + $0x34] sm:$0xf]
        %v1315 = vld [vmem:[%s656 + $0x38] sm:$0xf]
        %v1316 = vld [vmem:[%s656 + $0x3c] sm:$0xf]
        %v1317 = vld [vmem:[%s659] sm:$0x1]
        %v1318 = vsel %vm671, %v1293, 0.0
        %1319 = vadd.xlane.f32.xlu0 %v1318
        %v1320 = vpop.xlane.xlu0 %1319
        %v1321 = vmul.f32 %v1320, %v675
        %v1322 = vsub.f32 %v1293, %v1321
        %v1323 = vmul.f32 %v1322, %v1322
        %v1324 = vsel %vm671, %v1323, 0.0
        %1325 = vadd.xlane.f32.xlu0 %v1324
        %v1326 = vpop.xlane.xlu0 %1325
        %v1327 = vmul.f32 %v1326, %v675
        %v1328 = vadd.f32 %v1327, 1e-05
        %v1329 = vrsqrt.pop %v1328
        %v1330 = vmul.f32 %v1322, %v1329
        %v1332 = vlaneseq
        %v1333 = vshrl.u32 %v1332, 7
        %v1334 = vsub.s32 0, %v1333
        %v1335 = vrot.slane %v1294, %v1334
        %v1337 = vmul.f32 %v1330, %v1335
        %v1339 = vlaneseq
        %v1340 = vshrl.u32 %v1339, 7
        %v1341 = vsub.s32 0, %v1340
        %v1342 = vrot.slane %v1295, %v1341
        %v1344 = vadd.f32 %v1337, %v1342
        %v1345 = vpack.c.bf16 %v1344, %v1344
        %v1347 = vlaneseq
        %v1348 = vshrl.u32 %v1347, 7
        %v1349 = vsub.s32 0, %v1348
        %v1350 = vrot.slane %v1300, %v1349
        %v1356 = vunpack.c.l.b16 %v1296
        %v1357 = vunpack.c.l.b16 %v1297
        %v1358 = vunpack.c.l.b16 %v1298
        %v1359 = vunpack.c.l.b16 %v1299
        %v1360 = vpack.c.b16 %v1357, %v1356
        %v1361 = vpack.c.b16 %v1359, %v1358
        %v1365 = vsel %vm671, %v1345, 0
        %1367 = vmatprep.subr.bf16.mxu0 0
        %1368 = vmatpush1.bf16.msra.mxu0 0
        %1369 = vmatprep.subr.bf16.mxu0 0
        %1370 = vmatpush1.bf16.msra.mxu0 0
        %1371 = vmatprep.subr.bf16.mxu0 0
        %1372 = vmatpush1.bf16.msra.mxu0 0
        %1373 = vmatprep.subr.bf16.mxu0 0
        %1374 = vmatpush1.bf16.msra.mxu0 0
        %1375 = vmatprep.subr.bf16.mxu0 0
        %1376 = vmatpush1.bf16.msra.mxu0 0
        %1377 = vmatprep.subr.bf16.mxu0 0
        %1378 = vmatpush1.bf16.msra.mxu0 0
        %1379 = vmatprep.subr.bf16.mxu0 0
        %1380 = vmatpush1.bf16.msra.mxu0 %v1361
        %1381 = vmatprep.subr.bf16.mxu0 0
        %1382 = vmatpush1.bf16.msra.mxu0 %v1360
        %1383 = vmatprep.subr.bf16.mxu0 0
        %1384 = vmatpush2.bf16.msra.mxu0 0
        %1385 = vmatprep.subr.bf16.mxu0 0
        %1386 = vmatpush2.bf16.msra.mxu0 0
        %1387 = vmatprep.subr.bf16.mxu0 0
        %1388 = vmatpush2.bf16.msra.mxu0 0
        %1389 = vmatprep.subr.bf16.mxu0 0
        %1390 = vmatpush2.bf16.msra.mxu0 0
        %1391 = vmatprep.subr.bf16.mxu0 0
        %1392 = vmatpush2.bf16.msra.mxu0 0
        %1393 = vmatprep.subr.bf16.mxu0 0
        %1394 = vmatpush2.bf16.msra.mxu0 0
        %1395 = vmatprep.subr.bf16.mxu0 0
        %1396 = vmatpush2.bf16.msra.mxu0 0
        %1397 = vmatprep.subr.bf16.mxu0 0
        %1398 = vmatpush2.bf16.msra.mxu0 0
        %1399 = vmatprep.mubr.bf16.mxu0 0
        %1400 = vmatmul.mubr.bf16.gmra.mxu0 %v1365
        %v1401 = vpop.f32.mrf.mxu0
        %v1402 = vadd.f32 %v1350, %v1401
        %v1403 = vpop.f32.mrf.mxu0
        %v1404 = vpop.f32.mrf.mxu0
        %v1405 = vpop.f32.mrf.mxu0
        %1406 = vdwg.mxu0
        %v1407 = vmul.f32 %v1402, 1.702
        %v1408 = vxor.u32 %v1407, 2147483648
        %v1409 = vmul.f32 %v1408, 1.442695
        %v1410 = vpow.pop %v1409
        %v1411 = vadd.f32 %v1410, 1.0
        %v1412 = vrcp.pop %v1411
        %v1413 = vmul.f32 1.0, %v1412
        %v1414 = vmul.f32 %v1402, %v1413
        %v1415 = vpack.c.bf16 %v1414, %v1414
        %v1417 = vlaneseq
        %v1418 = vshrl.u32 %v1417, 7
        %v1419 = vsub.s32 0, %v1418
        %v1420 = vrot.slane %v1317, %v1419
        %v1438 = vunpack.c.l.b16 %v1301
        %v1439 = vunpack.c.l.b16 %v1302
        %v1440 = vunpack.c.l.b16 %v1303
        %v1441 = vunpack.c.l.b16 %v1304
        %v1442 = vunpack.c.l.b16 %v1305
        %v1443 = vunpack.c.l.b16 %v1306
        %v1444 = vunpack.c.l.b16 %v1307
        %v1445 = vunpack.c.l.b16 %v1308
        %v1446 = vunpack.c.l.b16 %v1309
        %v1447 = vunpack.c.l.b16 %v1310
        %v1448 = vunpack.c.l.b16 %v1311
        %v1449 = vunpack.c.l.b16 %v1312
        %v1450 = vunpack.c.l.b16 %v1313
        %v1451 = vunpack.c.l.b16 %v1314
        %v1452 = vunpack.c.l.b16 %v1315
        %v1453 = vunpack.c.l.b16 %v1316
        %v1454 = vpack.c.b16 %v1439, %v1438
        %v1455 = vpack.c.b16 %v1441, %v1440
        %v1456 = vpack.c.b16 %v1443, %v1442
        %v1457 = vpack.c.b16 %v1445, %v1444
        %v1458 = vpack.c.b16 %v1447, %v1446
        %v1459 = vpack.c.b16 %v1449, %v1448
        %v1460 = vpack.c.b16 %v1451, %v1450
        %v1461 = vpack.c.b16 %v1453, %v1452
        %1470 = vmatprep.subr.bf16.mxu0 0
        %1471 = vmatpush1.bf16.msra.mxu0 %v1461
        %1472 = vmatprep.subr.bf16.mxu0 0
        %1473 = vmatpush1.bf16.msra.mxu0 %v1460
        %1474 = vmatprep.subr.bf16.mxu0 0
        %1475 = vmatpush1.bf16.msra.mxu0 %v1459
        %1476 = vmatprep.subr.bf16.mxu0 0
        %1477 = vmatpush1.bf16.msra.mxu0 %v1458
        %1478 = vmatprep.subr.bf16.mxu0 0
        %1479 = vmatpush1.bf16.msra.mxu0 %v1457
        %1480 = vmatprep.subr.bf16.mxu0 0
        %1481 = vmatpush1.bf16.msra.mxu0 %v1456
        %1482 = vmatprep.subr.bf16.mxu0 0
        %1483 = vmatpush1.bf16.msra.mxu0 %v1455
        %1484 = vmatprep.subr.bf16.mxu0 0
        %1485 = vmatpush1.bf16.msra.mxu0 %v1454
        %1486 = vmatprep.subr.bf16.mxu0 0
        %1487 = vmatpush2.bf16.msra.mxu0 0
        %1488 = vmatprep.subr.bf16.mxu0 0
        %1489 = vmatpush2.bf16.msra.mxu0 0
        %1490 = vmatprep.subr.bf16.mxu0 0
        %1491 = vmatpush2.bf16.msra.mxu0 0
        %1492 = vmatprep.subr.bf16.mxu0 0
        %1493 = vmatpush2.bf16.msra.mxu0 0
        %1494 = vmatprep.subr.bf16.mxu0 0
        %1495 = vmatpush2.bf16.msra.mxu0 0
        %1496 = vmatprep.subr.bf16.mxu0 0
        %1497 = vmatpush2.bf16.msra.mxu0 0
        %1498 = vmatprep.subr.bf16.mxu0 0
        %1499 = vmatpush2.bf16.msra.mxu0 0
        %1500 = vmatprep.subr.bf16.mxu0 0
        %1501 = vmatpush2.bf16.msra.mxu0 0
        %1502 = vmatprep.mubr.bf16.mxu0 0
        %1503 = vmatmul.mubr.bf16.gmra.mxu0 %v1415
        %v1504 = vpop.f32.mrf.mxu0
        %v1505 = vadd.f32 %v1420, %v1504
        %v1506 = vpop.f32.mrf.mxu0
        %v1507 = vpop.f32.mrf.mxu0
        %v1508 = vpop.f32.mrf.mxu0
        %1509 = vdwg.mxu0
        %v1510 = vadd.f32 %v1293, %v1505
        %1511 = vst.msk [vmem:[%s615] sm:$0xff] %vm671, %v1510
        %s1512 = sand.u32 %s388, 1
        %s1513 = scalar_lea.sflag [#allocation4], %s1512
        %s1514 = sand.u32 %s388, 1
        %s1515 = smul.addr %s1514, 8
        %s1516 = scalar_lea.vmem [#allocation5], %s1515
        // Predicated region
        $region81: #{tpu_custom_call.1} parent=71 // pred_check
          %p1517 = pneg %p398
        $region82: #{tpu_custom_call.1} parent=71 // pred_check_branch
          %1519 = sbr.rel (%p1517) target = $region84
        $region83: #{tpu_custom_call.1} parent=71 // pred_region
          %s1521 = ssub.s32 128, 128
          %1522 = vsyncadd %s1513, %s1521
          %s1523 = smul.addr %s34, 128
          %s1524 = scalar_lea.hbm %s13, %s1523
          %s1526 = sshll.u32 %s1516, 4
          %s1527 = int_to_ptr.vmem [resolvable:$true] %s1526
          %1529 = dma.vmem_to_hbm [thread:$0]  %s1527, 128, %s1524, %s1513
        $region84: #{tpu_custom_call.1} parent=71 // pred_fallthru
          _
      $region72: #{tpu_custom_call.1} parent=5 // pred_fallthru
        _
      %p1530 = scmp.le.s32.totalorder 2, %s25
      // Predicated region
      $region85: #{tpu_custom_call.1} parent=5 // pred_check
        %p1531 = pneg %p1530
      $region86: #{tpu_custom_call.1} parent=5 // pred_check_branch
        %1533 = sbr.rel (%p1531) target = $region88
      $region87: #{tpu_custom_call.1} parent=5 // pred_region
        %s1534 = ssub.s32 %s25, 2
        // Predicated region
        $region89: #{tpu_custom_call.1} parent=87 // pred_check
          %p1535 = pneg %p404
        $region90: #{tpu_custom_call.1} parent=87 // pred_check_branch
          %1537 = sbr.rel (%p1535) target = $region92
        $region91: #{tpu_custom_call.1} parent=87 // pred_region
          %s1538 = sand.u32 %s389, 1
          %s1539 = scalar_lea.sflag [#allocation4], %s1538
          %s1540 = sand.u32 %s389, 1
          %s1541 = smul.addr %s1540, 8
          %s1542 = scalar_lea.vmem [#allocation5], %s1541
          %1543 = dma.done %s1539, 128
        $region92: #{tpu_custom_call.1} parent=87 // pred_fallthru
          _
      $region88: #{tpu_custom_call.1} parent=5 // pred_fallthru
        _
    $region6: #{tpu_custom_call.1} parent=1 // loop_footer
      %s29 = sadd.s32 1, %s25
    $region7: #{tpu_custom_call.1} parent=1 // loop_footer_branch
      %24 = sbr.rel target = $region3
    $region8: #{tpu_custom_call.1} parent=1 // loop_exit
      _
    %1544 = vsyncpa [#allocation3], 1
    %s1545 = scalar_lea.sflag [#allocation3], 1
    %1546 = vsyncpa %s1545, 1
    %1547 = vsyncpa [#allocation4], 1
    %s1548 = scalar_lea.sflag [#allocation4], 1
    %1549 = vsyncpa %s1548, 1

</llo_original>
